<compile_context>
chip_gen: v7x
topology: tpu7x:2x2x1
jax: 0.10.0
libtpu: 0.0.40
codegen_flags: <defaults>
</compile_context>

<pallas_src>
import jax
import jax.numpy as jnp
from jax import lax
from jax.experimental import pallas as pl
from jax.experimental.pallas import tpu as pltpu


# ---------------------------------------------------------------------------
# Kernel
# ---------------------------------------------------------------------------
def tnn_kernel(x_ref,
               w1_ref, b1_ref,
               w2_ref, b2_ref,
               w3_ref, b3_ref,
               w4_ref, b4_ref,
               w5_ref, b5_ref,
               o_ref):
    """One batch tile of the fused 5-layer MLP + L2 normalize."""
    # x arrives f32; cast to bf16 in-kernel (hidden under spare VPU slots).
    x = x_ref[...].astype(jnp.bfloat16)

    # bf16 MXU inputs, f32 accumulation; bias/ReLU in f32, then immediately
    # downcast to bf16 so any VMEM-resident intermediates are half-width.
    h = jnp.dot(x, w1_ref[...], preferred_element_type=jnp.float32) + b1_ref[...]
    h = jnp.maximum(h, 0.0).astype(jnp.bfloat16)

    h = jnp.dot(h, w2_ref[...], preferred_element_type=jnp.float32) + b2_ref[...]
    h = jnp.maximum(h, 0.0).astype(jnp.bfloat16)

    h = jnp.dot(h, w3_ref[...], preferred_element_type=jnp.float32) + b3_ref[...]
    h = jnp.maximum(h, 0.0).astype(jnp.bfloat16)

    h = jnp.dot(h, w4_ref[...], preferred_element_type=jnp.float32) + b4_ref[...]
    h = jnp.maximum(h, 0.0).astype(jnp.bfloat16)

    out = jnp.dot(h, w5_ref[...], preferred_element_type=jnp.float32) + b5_ref[...]

    # F.normalize: out / max(||out||, 1e-12) == out * rsqrt(max(sumsq, 1e-24))
    sumsq = jnp.sum(out * out, axis=-1, keepdims=True)
    o_ref[...] = (out * lax.rsqrt(jnp.maximum(sumsq, 1e-24))).astype(o_ref.dtype)


# ---------------------------------------------------------------------------
# Wrapper
# ---------------------------------------------------------------------------
def _round_up(n, m):
    return ((n + m - 1) // m) * m


def _num_tensorcores():
    """2 TensorCores/chip on v7x; 1 on v5e/v6e.  Best-effort query."""
    try:
        kind = jax.devices()[0].device_kind.lower()
        if "v7" in kind:
            return 2
    except Exception:
        pass
    return 1


def _choose_tile_m(B, num_cores):
    """Pick the batch tile: one big tile when the batch is small, otherwise a
    large tile that minimizes (wasted rows + per-grid-step overhead), with an
    even number of grid steps preferred on 2-TensorCore chips."""
    Bp = _round_up(B, 8)
    single_cap = 1024 if num_cores == 1 else 512
    if Bp <= single_cap:
        return Bp

    cands = {1024, 512, 256, 128,
             min(1024, _round_up(-(-Bp // 2), 8)),
             min(1024, _round_up(-(-Bp // 4), 8))}
    best_key, best_t = None, 512
    for t in cands:
        if t < 128:
            continue
        g = -(-Bp // t)
        waste = g * t - Bp
        # one grid step ~0.35us ~= a couple hundred rows of MXU work here
        score = waste + 192 * g
        if num_cores >= 2 and g % 2 != 0:
            score += 1_000_000          # keep both TensorCores busy on v7x
        key = (score, -t)
        if best_key is None or key < best_key:
            best_key, best_t = key, t
    return best_t


def prepare_params(params):
    """One-time conversion of weights to bf16 (MXU inputs) and biases to f32.

    Call this ONCE outside the hot loop so no per-call convert ops hit HBM."""
    prepped = {}
    for k in range(1, 6):
        prepped[f"w{k}"] = params[f"w{k}"].astype(jnp.bfloat16)
        prepped[f"b{k}"] = params[f"b{k}"].astype(jnp.float32)
    return prepped


def tnn_forward(x, prepared, *, tile_m=None, out_dtype=jnp.float32):
    """x: (B, D) float32.  prepared: output of prepare_params (bf16 W, f32 b)."""
    B, D = x.shape
    num_cores = _num_tensorcores()
    if tile_m is None:
        tile_m = _choose_tile_m(B, num_cores)
    tile_m = max(8, _round_up(int(tile_m), 8))

    # Only pad rows to a sublane multiple (8); the (possibly partial) last grid
    # tile is handled by Pallas with masked writes -- no full-tile jnp.pad.
    Bp = _round_up(B, 8)
    x_in = x if Bp == B else jnp.pad(x, ((0, Bp - B), (0, 0)))

    w1, b1 = prepared["w1"], prepared["b1"]
    w2, b2 = prepared["w2"], prepared["b2"]
    w3, b3 = prepared["w3"], prepared["b3"]
    w4, b4 = prepared["w4"], prepared["b4"]
    w5, b5 = prepared["w5"], prepared["b5"]
    out_dim = w5.shape[1]
    grid = pl.cdiv(Bp, tile_m)

    # Weights / biases: constant across the grid -> fully VMEM-resident,
    # single-buffered (no per-step pipelining / double-buffer reservation).
    def vmem():
        return pl.BlockSpec(memory_space=pltpu.MemorySpace.VMEM)

    grid_spec = pltpu.PrefetchScalarGridSpec(
        num_scalar_prefetch=0,
        grid=(grid,),
        in_specs=[
            pl.BlockSpec((tile_m, D), lambda i: (i, 0)),
            vmem(), vmem(),
            vmem(), vmem(),
            vmem(), vmem(),
            vmem(), vmem(),
            vmem(), vmem(),
        ],
        out_specs=pl.BlockSpec((tile_m, out_dim), lambda i: (i, 0)),
    )

    # Explicit VMEM budget (double-buffered x/out tiles, f32 hidden temps,
    # bf16 weights), clamped to stay safe on v7x's 64 MiB physical VMEM.
    out_itemsize = jnp.dtype(out_dtype).itemsize
    w_bytes = sum(int(prepared[f"w{k}"].size) * 2 +
                  int(prepared[f"b{k}"].size) * 4 for k in range(1, 6))
    act_bytes = tile_m * 512 * 4 * 2
    io_bytes = 2 * tile_m * D * 4 + 2 * tile_m * out_dim * out_itemsize
    vmem_limit = int(max(16 * 1024 * 1024,
                         min(40 * 1024 * 1024,
                             2 * (w_bytes + act_bytes + io_bytes))))

    # Scheduler hint: 5 GEMMs per row + one rsqrt per row.
    mac = (D * 512 + 512 * 512 + 512 * 256 + 256 * 128 + 128 * 128)
    rows = grid * tile_m
    cost = pl.CostEstimate(
        flops=2 * rows * mac,
        transcendentals=rows,
        bytes_accessed=w_bytes + Bp * D * 4 + Bp * out_dim * out_itemsize,
    )

    out = pl.pallas_call(
        tnn_kernel,
        out_shape=jax.ShapeDtypeStruct((Bp, out_dim), out_dtype),
        grid_spec=grid_spec,
        compiler_params=pltpu.CompilerParams(
            dimension_semantics=("parallel",),
            vmem_limit_bytes=vmem_limit,
        ),
        cost_estimate=cost,
    )(x_in, w1, b1, w2, b2, w3, b3, w4, b4, w5, b5)

    return out[:B] if Bp != B else out


# ---------------------------------------------------------------------------
# Init + pure-JAX reference (for correctness checking)
# ---------------------------------------------------------------------------
def init_params(key, input_dim):
    """Deterministic init matching nn.Linear's default U(-1/sqrt(fan_in), +)."""
    dims = [(input_dim, 512), (512, 512), (512, 256), (256, 128), (128, 128)]
    params = {}
    for idx, (fan_in, fan_out) in enumerate(dims, start=1):
        key, kw, kb = jax.random.split(key, 3)
        bound = 1.0 / jnp.sqrt(float(fan_in))
        params[f"w{idx}"] = jax.random.uniform(
            kw, (fan_in, fan_out), jnp.float32, -bound, bound)
        params[f"b{idx}"] = jax.random.uniform(
            kb, (1, fan_out), jnp.float32, -bound, bound)
    return params


def tnn_reference(x, params):
    h = jax.nn.relu(x @ params["w1"] + params["b1"])
    h = jax.nn.relu(h @ params["w2"] + params["b2"])
    h = jax.nn.relu(h @ params["w3"] + params["b3"])
    h = jax.nn.relu(h @ params["w4"] + params["b4"])
    out = h @ params["w5"] + params["b5"]
    norm = jnp.sqrt(jnp.sum(out * out, axis=-1, keepdims=True))
    return out / jnp.maximum(norm, 1e-12)


if __name__ == "__main__":
    key = jax.random.PRNGKey(0)
    k_x1, k_x2, k_p = jax.random.split(key, 3)

    D = 64
    params = init_params(k_p, D)
    prepared = prepare_params(params)   # one-time bf16 weight conversion

    # Case 1: small batch -> whole batch in a single tile.
    x_small = jax.random.normal(k_x1, (16, D), jnp.float32)
    out_small = jax.block_until_ready(tnn_forward(x_small, prepared))
    ref_small = tnn_reference(x_small, params)
    assert out_small.shape == (16, 128)
    # bf16 matmul inputs -> looser tolerance vs. the f32 reference.
    assert jnp.allclose(out_small, ref_small, atol=2e-2, rtol=2e-2), \
        "mismatch vs reference (small batch)"
    assert jnp.allclose(jnp.linalg.norm(out_small, axis=-1), 1.0, atol=1e-3)

    # Case 2: batch not divisible by the tile -> multi-step grid with a
    # partial (masked) last tile, no full-tile padding materialized.
    x_big = jax.random.normal(k_x2, (384, D), jnp.float32)
    out_big = jax.block_until_ready(tnn_forward(x_big, prepared, tile_m=256))
    ref_big = tnn_reference(x_big, params)
    assert out_big.shape == (384, 128)
    assert jnp.allclose(out_big, ref_big, atol=2e-2, rtol=2e-2), \
        "mismatch vs reference (partial last tile)"
    assert jnp.allclose(jnp.linalg.norm(out_big, axis=-1), 1.0, atol=1e-3)

    # Case 3: auto-chosen tile for the same batch (single big tile path).
    out_auto = jax.block_until_ready(tnn_forward(x_big, prepared))
    assert out_auto.shape == (384, 128)
    assert jnp.allclose(out_auto, ref_big, atol=2e-2, rtol=2e-2), \
        "mismatch vs reference (auto tile)"

    print("KERNEL_OK")
</pallas_src>

<mosaic_0001>
module attributes {stable_mosaic.version = 11 : i64} {
  func.func @tnn_kernel(%arg0: i32, %arg1: memref<16x64xf32, #tpu.memory_space<vmem>>, %arg2: memref<64x512xbf16, #tpu.memory_space<vmem>>, %arg3: memref<1x512xf32, #tpu.memory_space<vmem>>, %arg4: memref<512x512xbf16, #tpu.memory_space<vmem>>, %arg5: memref<1x512xf32, #tpu.memory_space<vmem>>, %arg6: memref<512x256xbf16, #tpu.memory_space<vmem>>, %arg7: memref<1x256xf32, #tpu.memory_space<vmem>>, %arg8: memref<256x128xbf16, #tpu.memory_space<vmem>>, %arg9: memref<1x128xf32, #tpu.memory_space<vmem>>, %arg10: memref<128x128xbf16, #tpu.memory_space<vmem>>, %arg11: memref<1x128xf32, #tpu.memory_space<vmem>>, %arg12: memref<16x128xf32, #tpu.memory_space<vmem>>) attributes {dimension_semantics = [#tpu.dimension_semantics<parallel>], iteration_bounds = array<i64: 1>, scalar_prefetch = 0 : i64, scratch_operands = 0 : i64, tpu.core_type = #tpu.core_type<tc>, window_params = [{transform_indices = @transform_0, window_bounds = array<i64: 16, 64>}, {pipeline_mode = #tpu.pipeline_mode<synchronous>, transform_indices = @transform_1, window_bounds = array<i64: 64, 512>}, {pipeline_mode = #tpu.pipeline_mode<synchronous>, transform_indices = @transform_2, window_bounds = array<i64: 1, 512>}, {pipeline_mode = #tpu.pipeline_mode<synchronous>, transform_indices = @transform_3, window_bounds = array<i64: 512, 512>}, {pipeline_mode = #tpu.pipeline_mode<synchronous>, transform_indices = @transform_4, window_bounds = array<i64: 1, 512>}, {pipeline_mode = #tpu.pipeline_mode<synchronous>, transform_indices = @transform_5, window_bounds = array<i64: 512, 256>}, {pipeline_mode = #tpu.pipeline_mode<synchronous>, transform_indices = @transform_6, window_bounds = array<i64: 1, 256>}, {pipeline_mode = #tpu.pipeline_mode<synchronous>, transform_indices = @transform_7, window_bounds = array<i64: 256, 128>}, {pipeline_mode = #tpu.pipeline_mode<synchronous>, transform_indices = @transform_8, window_bounds = array<i64: 1, 128>}, {pipeline_mode = #tpu.pipeline_mode<synchronous>, transform_indices = @transform_9, window_bounds = array<i64: 128, 128>}, {pipeline_mode = #tpu.pipeline_mode<synchronous>, transform_indices = @transform_10, window_bounds = array<i64: 1, 128>}, {transform_indices = @transform_11, window_bounds = array<i64: 16, 128>}]} {
    %c0 = arith.constant 0 : index
    %c0_0 = arith.constant 0 : index
    %0 = vector.load %arg1[%c0, %c0_0] : memref<16x64xf32, #tpu.memory_space<vmem>>, vector<16x64xf32>
    %1 = arith.truncf %0 : vector<16x64xf32> to vector<16x64xbf16>
    %c0_1 = arith.constant 0 : index
    %c0_2 = arith.constant 0 : index
    %2 = vector.load %arg2[%c0_1, %c0_2] : memref<64x512xbf16, #tpu.memory_space<vmem>>, vector<64x512xbf16>
    %cst = arith.constant dense<0.000000e+00> : vector<16x512xf32>
    %3 = tpu.matmul %1, %2, %cst {dimension_numbers = #tpu.dot_dimension_numbers<[1], [0], [0], [1], [0, 0, 1, 1], [], []>} : vector<16x64xbf16>, vector<64x512xbf16>, vector<16x512xf32> -> vector<16x512xf32>
    %c0_3 = arith.constant 0 : index
    %c0_4 = arith.constant 0 : index
    %4 = vector.load %arg3[%c0_3, %c0_4] : memref<1x512xf32, #tpu.memory_space<vmem>>, vector<1x512xf32>
    %5 = vector.broadcast %4 : vector<1x512xf32> to vector<16x512xf32>
    %6 = arith.addf %3, %5 : vector<16x512xf32>
    %cst_5 = arith.constant 0.000000e+00 : f32
    %7 = vector.broadcast %cst_5 : f32 to vector<16x512xf32>
    %8 = arith.maximumf %6, %7 : vector<16x512xf32>
    %9 = arith.truncf %8 : vector<16x512xf32> to vector<16x512xbf16>
    %c0_6 = arith.constant 0 : index
    %c0_7 = arith.constant 0 : index
    %10 = vector.load %arg4[%c0_6, %c0_7] : memref<512x512xbf16, #tpu.memory_space<vmem>>, vector<512x512xbf16>
    %cst_8 = arith.constant dense<0.000000e+00> : vector<16x512xf32>
    %11 = tpu.matmul %9, %10, %cst_8 {dimension_numbers = #tpu.dot_dimension_numbers<[1], [0], [0], [1], [0, 0, 1, 1], [], []>} : vector<16x512xbf16>, vector<512x512xbf16>, vector<16x512xf32> -> vector<16x512xf32>
    %c0_9 = arith.constant 0 : index
    %c0_10 = arith.constant 0 : index
    %12 = vector.load %arg5[%c0_9, %c0_10] : memref<1x512xf32, #tpu.memory_space<vmem>>, vector<1x512xf32>
    %13 = vector.broadcast %12 : vector<1x512xf32> to vector<16x512xf32>
    %14 = arith.addf %11, %13 : vector<16x512xf32>
    %cst_11 = arith.constant 0.000000e+00 : f32
    %15 = vector.broadcast %cst_11 : f32 to vector<16x512xf32>
    %16 = arith.maximumf %14, %15 : vector<16x512xf32>
    %17 = arith.truncf %16 : vector<16x512xf32> to vector<16x512xbf16>
    %c0_12 = arith.constant 0 : index
    %c0_13 = arith.constant 0 : index
    %18 = vector.load %arg6[%c0_12, %c0_13] : memref<512x256xbf16, #tpu.memory_space<vmem>>, vector<512x256xbf16>
    %cst_14 = arith.constant dense<0.000000e+00> : vector<16x256xf32>
    %19 = tpu.matmul %17, %18, %cst_14 {dimension_numbers = #tpu.dot_dimension_numbers<[1], [0], [0], [1], [0, 0, 1, 1], [], []>} : vector<16x512xbf16>, vector<512x256xbf16>, vector<16x256xf32> -> vector<16x256xf32>
    %c0_15 = arith.constant 0 : index
    %c0_16 = arith.constant 0 : index
    %20 = vector.load %arg7[%c0_15, %c0_16] : memref<1x256xf32, #tpu.memory_space<vmem>>, vector<1x256xf32>
    %21 = vector.broadcast %20 : vector<1x256xf32> to vector<16x256xf32>
    %22 = arith.addf %19, %21 : vector<16x256xf32>
    %cst_17 = arith.constant 0.000000e+00 : f32
    %23 = vector.broadcast %cst_17 : f32 to vector<16x256xf32>
    %24 = arith.maximumf %22, %23 : vector<16x256xf32>
    %25 = arith.truncf %24 : vector<16x256xf32> to vector<16x256xbf16>
    %c0_18 = arith.constant 0 : index
    %c0_19 = arith.constant 0 : index
    %26 = vector.load %arg8[%c0_18, %c0_19] : memref<256x128xbf16, #tpu.memory_space<vmem>>, vector<256x128xbf16>
    %cst_20 = arith.constant dense<0.000000e+00> : vector<16x128xf32>
    %27 = tpu.matmul %25, %26, %cst_20 {dimension_numbers = #tpu.dot_dimension_numbers<[1], [0], [0], [1], [0, 0, 1, 1], [], []>} : vector<16x256xbf16>, vector<256x128xbf16>, vector<16x128xf32> -> vector<16x128xf32>
    %c0_21 = arith.constant 0 : index
    %c0_22 = arith.constant 0 : index
    %28 = vector.load %arg9[%c0_21, %c0_22] : memref<1x128xf32, #tpu.memory_space<vmem>>, vector<1x128xf32>
    %29 = vector.broadcast %28 : vector<1x128xf32> to vector<16x128xf32>
    %30 = arith.addf %27, %29 : vector<16x128xf32>
    %cst_23 = arith.constant 0.000000e+00 : f32
    %31 = vector.broadcast %cst_23 : f32 to vector<16x128xf32>
    %32 = arith.maximumf %30, %31 : vector<16x128xf32>
    %33 = arith.truncf %32 : vector<16x128xf32> to vector<16x128xbf16>
    %c0_24 = arith.constant 0 : index
    %c0_25 = arith.constant 0 : index
    %34 = vector.load %arg10[%c0_24, %c0_25] : memref<128x128xbf16, #tpu.memory_space<vmem>>, vector<128x128xbf16>
    %cst_26 = arith.constant dense<0.000000e+00> : vector<16x128xf32>
    %35 = tpu.matmul %33, %34, %cst_26 {dimension_numbers = #tpu.dot_dimension_numbers<[1], [0], [0], [1], [0, 0, 1, 1], [], []>} : vector<16x128xbf16>, vector<128x128xbf16>, vector<16x128xf32> -> vector<16x128xf32>
    %c0_27 = arith.constant 0 : index
    %c0_28 = arith.constant 0 : index
    %36 = vector.load %arg11[%c0_27, %c0_28] : memref<1x128xf32, #tpu.memory_space<vmem>>, vector<1x128xf32>
    %37 = vector.broadcast %36 : vector<1x128xf32> to vector<16x128xf32>
    %38 = arith.addf %35, %37 : vector<16x128xf32>
    %39 = arith.mulf %38, %38 : vector<16x128xf32>
    %cst_29 = arith.constant dense<0.000000e+00> : vector<16xf32>
    %40 = vector.multi_reduction <add>, %39, %cst_29 [1] : vector<16x128xf32> to vector<16xf32>
    %41 = vector.shape_cast %40 : vector<16xf32> to vector<16x1xf32>
    %cst_30 = arith.constant 1.000000e-24 : f32
    %42 = vector.broadcast %cst_30 : f32 to vector<16x1xf32>
    %43 = arith.maximumf %41, %42 : vector<16x1xf32>
    %44 = math.rsqrt %43 : vector<16x1xf32>
    %45 = vector.broadcast %44 : vector<16x1xf32> to vector<16x128xf32>
    %46 = arith.mulf %38, %45 : vector<16x128xf32>
    %c0_31 = arith.constant 0 : index
    %c0_32 = arith.constant 0 : index
    %47 = vector.load %arg12[%c0_31, %c0_32] : memref<16x128xf32, #tpu.memory_space<vmem>>, vector<16x128xf32>
    tpu.vector_store %arg12[%c0_31, %c0_32], %46 {strides = array<i32>} : memref<16x128xf32, #tpu.memory_space<vmem>>, vector<16x128xf32>,
    return
  }
  func.func @transform_0(%arg0: i32) -> (i32, i32) {
    %c0_i32 = arith.constant 0 : i32
    %c0_i32_0 = arith.constant 0 : i32
    return %arg0, %c0_i32 : i32, i32
  }
  func.func @transform_1(%arg0: i32) -> (i32, i32) {
    %c0_i32 = arith.constant 0 : i32
    %c0_i32_0 = arith.constant 0 : i32
    %c0_i32_1 = arith.constant 0 : i32
    return %c0_i32, %c0_i32_0 : i32, i32
  }
  func.func @transform_2(%arg0: i32) -> (i32, i32) {
    %c0_i32 = arith.constant 0 : i32
    %c0_i32_0 = arith.constant 0 : i32
    %c0_i32_1 = arith.constant 0 : i32
    return %c0_i32, %c0_i32_0 : i32, i32
  }
  func.func @transform_3(%arg0: i32) -> (i32, i32) {
    %c0_i32 = arith.constant 0 : i32
    %c0_i32_0 = arith.constant 0 : i32
    %c0_i32_1 = arith.constant 0 : i32
    return %c0_i32, %c0_i32_0 : i32, i32
  }
  func.func @transform_4(%arg0: i32) -> (i32, i32) {
    %c0_i32 = arith.constant 0 : i32
    %c0_i32_0 = arith.constant 0 : i32
    %c0_i32_1 = arith.constant 0 : i32
    return %c0_i32, %c0_i32_0 : i32, i32
  }
  func.func @transform_5(%arg0: i32) -> (i32, i32) {
    %c0_i32 = arith.constant 0 : i32
    %c0_i32_0 = arith.constant 0 : i32
    %c0_i32_1 = arith.constant 0 : i32
    return %c0_i32, %c0_i32_0 : i32, i32
  }
  func.func @transform_6(%arg0: i32) -> (i32, i32) {
    %c0_i32 = arith.constant 0 : i32
    %c0_i32_0 = arith.constant 0 : i32
    %c0_i32_1 = arith.constant 0 : i32
    return %c0_i32, %c0_i32_0 : i32, i32
  }
  func.func @transform_7(%arg0: i32) -> (i32, i32) {
    %c0_i32 = arith.constant 0 : i32
    %c0_i32_0 = arith.constant 0 : i32
    %c0_i32_1 = arith.constant 0 : i32
    return %c0_i32, %c0_i32_0 : i32, i32
  }
  func.func @transform_8(%arg0: i32) -> (i32, i32) {
    %c0_i32 = arith.constant 0 : i32
    %c0_i32_0 = arith.constant 0 : i32
    %c0_i32_1 = arith.constant 0 : i32
    return %c0_i32, %c0_i32_0 : i32, i32
  }
  func.func @transform_9(%arg0: i32) -> (i32, i32) {
    %c0_i32 = arith.constant 0 : i32
    %c0_i32_0 = arith.constant 0 : i32
    %c0_i32_1 = arith.constant 0 : i32
    return %c0_i32, %c0_i32_0 : i32, i32
  }
  func.func @transform_10(%arg0: i32) -> (i32, i32) {
    %c0_i32 = arith.constant 0 : i32
    %c0_i32_0 = arith.constant 0 : i32
    %c0_i32_1 = arith.constant 0 : i32
    return %c0_i32, %c0_i32_0 : i32, i32
  }
  func.func @transform_11(%arg0: i32) -> (i32, i32) {
    %c0_i32 = arith.constant 0 : i32
    %c0_i32_0 = arith.constant 0 : i32
    return %arg0, %c0_i32 : i32, i32
  }
}

</mosaic_0001>

<llo_original>
// kernel: tpu_custom_call.1
$region0: #{tpu_custom_call.1}
  #allocation0 [shape = 'u32[]', space=smem, size = 0x4, offset = 0x4, fixed_abs, tag = 'smem constant byte address 0x4 - core index']
  #allocation1 [shape = 'u32[144,128]{1,0:T(1,128)}', space=vmem, size = 0x12000, scoped, tag = 'internal scratch']
  %s0 = inlined_call_operand.hbm [shape: f32[16,64], index: 0, kind: input, shape index: {}]
  %s1 = inlined_call_operand.hbm [shape: bf16[64,512], index: 1, kind: input, shape index: {}]
  %s2 = inlined_call_operand.vmem [shape: f32[1,512], index: 2, kind: input, shape index: {}]
  %s3 = inlined_call_operand.hbm [shape: bf16[512,512], index: 3, kind: input, shape index: {}]
  %s4 = inlined_call_operand.vmem [shape: f32[1,512], index: 4, kind: input, shape index: {}]
  %s5 = inlined_call_operand.hbm [shape: bf16[512,256], index: 5, kind: input, shape index: {}]
  %s6 = inlined_call_operand.vmem [shape: f32[1,256], index: 6, kind: input, shape index: {}]
  %s7 = inlined_call_operand.hbm [shape: bf16[256,128], index: 7, kind: input, shape index: {}]
  %s8 = inlined_call_operand.vmem [shape: f32[1,128], index: 8, kind: input, shape index: {}]
  %s9 = inlined_call_operand.hbm [shape: bf16[128,128], index: 9, kind: input, shape index: {}]
  %s10 = inlined_call_operand.vmem [shape: f32[1,128], index: 10, kind: input, shape index: {}]
  %s11 = inlined_call_operand.hbm [shape: f32[16,128], index: 11, kind: output, shape index: {}]
  %s12 = sld [smem:[#allocation0]]
  $region78: #{tpu_custom_call.1} parent=0
    _
  %s14 = ssub.s32 1, %s12
  %s15 = scalar_select 0, %s14, %s12
  $region1: #{tpu_custom_call.1} parent=0
    #allocation2 [shape = 'u8[8192]{0}', space=vmem, size = 0x2000, scoped, tag = 'input window, operand 0, single buffered']
    #allocation3 [shape = 's32[1]{0}', space=sflag, size = 0x4, scoped, tag = 'scoped memory for tpu_custom_call.1']
    #allocation4 [shape = 's32[1]{0}', space=sflag, size = 0x4, scoped, tag = 'scoped memory for tpu_custom_call.1']
    #allocation5 [shape = 'u8[65536]{0}', space=vmem, size = 0x10000, scoped, tag = 'input window, operand 1, single buffered']
    #allocation6 [shape = 's32[1]{0}', space=sflag, size = 0x4, scoped, tag = 'scoped memory for tpu_custom_call.1']
    #allocation7 [shape = 'u8[524288]{0}', space=vmem, size = 0x80000, scoped, tag = 'input window, operand 3, single buffered']
    #allocation8 [shape = 'u8[262144]{0}', space=vmem, size = 0x40000, scoped, tag = 'input window, operand 5, single buffered']
    #allocation9 [shape = 's32[1]{0}', space=sflag, size = 0x4, scoped, tag = 'scoped memory for tpu_custom_call.1']
    #allocation10 [shape = 'u8[65536]{0}', space=vmem, size = 0x10000, scoped, tag = 'input window, operand 7, single buffered']
    #allocation11 [shape = 'u8[32768]{0}', space=vmem, size = 0x8000, scoped, tag = 'input window, operand 9, single buffered']
    #allocation12 [shape = 's32[1]{0}', space=sflag, size = 0x4, scoped, tag = 'scoped memory for tpu_custom_call.1']
    #allocation13 [shape = 'u8[8192]{0}', space=vmem, size = 0x2000, scoped, tag = 'output window, operand 0, single buffered']
    %16 = vsyncpa [#allocation3], 0
    %17 = vsyncpa [#allocation6], 0
    %18 = vsyncpa [#allocation9], 0
    %19 = vsyncpa [#allocation12], 0
    %20 = vsyncpa [#allocation4], 0
    // Predicated region
    $region2: #{tpu_custom_call.1} parent=1 // pred_check
      _
    $region3: #{tpu_custom_call.1} parent=1 // pred_check_branch
      %22 = sbr.rel (0) target = $region5
    $region4: #{tpu_custom_call.1} parent=1 // pred_region
      %s24 = ssub.s32 256, 256
      %25 = vsyncadd [#allocation3], %s24
      %s26 = sshll.u32 [#allocation2], 4
      %s27 = int_to_ptr.vmem [resolvable:$true] %s26
      %32 = dma.hbm_to_vmem [thread:$0]  %s0, 256, %s27, [#allocation3], 128, 128, 8
    $region5: #{tpu_custom_call.1} parent=1 // pred_fallthru
      _
    // Predicated region
    $region6: #{tpu_custom_call.1} parent=1 // pred_check
      _
    $region7: #{tpu_custom_call.1} parent=1 // pred_check_branch
      %34 = sbr.rel (0) target = $region9
    $region8: #{tpu_custom_call.1} parent=1 // pred_region
      %s36 = ssub.s32 2048, 2048
      %37 = vsyncadd [#allocation6], %s36
      %s38 = sshll.u32 [#allocation5], 4
      %s39 = int_to_ptr.vmem [resolvable:$true] %s38
      %44 = dma.hbm_to_vmem [thread:$0]  %s1, 2048, %s39, [#allocation6], 256, 256, 16
    $region9: #{tpu_custom_call.1} parent=1 // pred_fallthru
      _
    // Predicated region
    $region10: #{tpu_custom_call.1} parent=1 // pred_check
      _
    $region11: #{tpu_custom_call.1} parent=1 // pred_check_branch
      %46 = sbr.rel (0) target = $region13
    $region12: #{tpu_custom_call.1} parent=1 // pred_region
      _
    $region13: #{tpu_custom_call.1} parent=1 // pred_fallthru
      _
    // Predicated region
    $region14: #{tpu_custom_call.1} parent=1 // pred_check
      _
    $region15: #{tpu_custom_call.1} parent=1 // pred_check_branch
      %48 = sbr.rel (0) target = $region17
    $region16: #{tpu_custom_call.1} parent=1 // pred_region
      %s50 = ssub.s32 16384, 16384
      %51 = vsyncadd [#allocation6], %s50
      %s52 = sshll.u32 [#allocation7], 4
      %s53 = int_to_ptr.vmem [resolvable:$true] %s52
      %58 = dma.hbm_to_vmem [thread:$0]  %s3, 16384, %s53, [#allocation6], 256, 256, 16
    $region17: #{tpu_custom_call.1} parent=1 // pred_fallthru
      _
    // Predicated region
    $region18: #{tpu_custom_call.1} parent=1 // pred_check
      _
    $region19: #{tpu_custom_call.1} parent=1 // pred_check_branch
      %60 = sbr.rel (0) target = $region21
    $region20: #{tpu_custom_call.1} parent=1 // pred_region
      _
    $region21: #{tpu_custom_call.1} parent=1 // pred_fallthru
      _
    // Predicated region
    $region22: #{tpu_custom_call.1} parent=1 // pred_check
      _
    $region23: #{tpu_custom_call.1} parent=1 // pred_check_branch
      %62 = sbr.rel (0) target = $region25
    $region24: #{tpu_custom_call.1} parent=1 // pred_region
      %s64 = ssub.s32 8192, 8192
      %65 = vsyncadd [#allocation9], %s64
      %s66 = sshll.u32 [#allocation8], 4
      %s67 = int_to_ptr.vmem [resolvable:$true] %s66
      %72 = dma.hbm_to_vmem [thread:$0]  %s5, 8192, %s67, [#allocation9], 128, 128, 8
    $region25: #{tpu_custom_call.1} parent=1 // pred_fallthru
      _
    // Predicated region
    $region26: #{tpu_custom_call.1} parent=1 // pred_check
      _
    $region27: #{tpu_custom_call.1} parent=1 // pred_check_branch
      %74 = sbr.rel (0) target = $region29
    $region28: #{tpu_custom_call.1} parent=1 // pred_region
      _
    $region29: #{tpu_custom_call.1} parent=1 // pred_fallthru
      _
    // Predicated region
    $region30: #{tpu_custom_call.1} parent=1 // pred_check
      _
    $region31: #{tpu_custom_call.1} parent=1 // pred_check_branch
      %76 = sbr.rel (0) target = $region33
    $region32: #{tpu_custom_call.1} parent=1 // pred_region
      %s78 = ssub.s32 2048, 2048
      %79 = vsyncadd [#allocation9], %s78
      %s80 = sshll.u32 [#allocation10], 4
      %s81 = int_to_ptr.vmem [resolvable:$true] %s80
      %86 = dma.hbm_to_vmem [thread:$0]  %s7, 2048, %s81, [#allocation9], 64, 64, 4
    $region33: #{tpu_custom_call.1} parent=1 // pred_fallthru
      _
    // Predicated region
    $region34: #{tpu_custom_call.1} parent=1 // pred_check
      _
    $region35: #{tpu_custom_call.1} parent=1 // pred_check_branch
      %88 = sbr.rel (0) target = $region37
    $region36: #{tpu_custom_call.1} parent=1 // pred_region
      _
    $region37: #{tpu_custom_call.1} parent=1 // pred_fallthru
      _
    // Predicated region
    $region38: #{tpu_custom_call.1} parent=1 // pred_check
      _
    $region39: #{tpu_custom_call.1} parent=1 // pred_check_branch
      %90 = sbr.rel (0) target = $region41
    $region40: #{tpu_custom_call.1} parent=1 // pred_region
      %s92 = ssub.s32 1024, 1024
      %93 = vsyncadd [#allocation12], %s92
      %s94 = sshll.u32 [#allocation11], 4
      %s95 = int_to_ptr.vmem [resolvable:$true] %s94
      %100 = dma.hbm_to_vmem [thread:$0]  %s9, 1024, %s95, [#allocation12], 64, 64, 4
    $region41: #{tpu_custom_call.1} parent=1 // pred_fallthru
      _
    // Predicated region
    $region42: #{tpu_custom_call.1} parent=1 // pred_check
      _
    $region43: #{tpu_custom_call.1} parent=1 // pred_check_branch
      %102 = sbr.rel (0) target = $region45
    $region44: #{tpu_custom_call.1} parent=1 // pred_region
      _
    $region45: #{tpu_custom_call.1} parent=1 // pred_fallthru
      _
    // Predicated region
    $region46: #{tpu_custom_call.1} parent=1 // pred_check
      _
    $region47: #{tpu_custom_call.1} parent=1 // pred_check_branch
      %104 = sbr.rel (0) target = $region49
    $region48: #{tpu_custom_call.1} parent=1 // pred_region
      %105 = dma.done [#allocation3], 256
    $region49: #{tpu_custom_call.1} parent=1 // pred_fallthru
      _
    // Predicated region
    $region50: #{tpu_custom_call.1} parent=1 // pred_check
      _
    $region51: #{tpu_custom_call.1} parent=1 // pred_check_branch
      %107 = sbr.rel (0) target = $region53
    $region52: #{tpu_custom_call.1} parent=1 // pred_region
      %108 = dma.done [#allocation6], 2048
    $region53: #{tpu_custom_call.1} parent=1 // pred_fallthru
      _
    // Predicated region
    $region54: #{tpu_custom_call.1} parent=1 // pred_check
      _
    $region55: #{tpu_custom_call.1} parent=1 // pred_check_branch
      %110 = sbr.rel (0) target = $region57
    $region56: #{tpu_custom_call.1} parent=1 // pred_region
      %111 = dma.done [#allocation6], 16384
    $region57: #{tpu_custom_call.1} parent=1 // pred_fallthru
      _
    // Predicated region
    $region58: #{tpu_custom_call.1} parent=1 // pred_check
      _
    $region59: #{tpu_custom_call.1} parent=1 // pred_check_branch
      %113 = sbr.rel (0) target = $region61
    $region60: #{tpu_custom_call.1} parent=1 // pred_region
      %114 = dma.done [#allocation9], 8192
    $region61: #{tpu_custom_call.1} parent=1 // pred_fallthru
      _
    // Predicated region
    $region62: #{tpu_custom_call.1} parent=1 // pred_check
      _
    $region63: #{tpu_custom_call.1} parent=1 // pred_check_branch
      %116 = sbr.rel (0) target = $region65
    $region64: #{tpu_custom_call.1} parent=1 // pred_region
      %117 = dma.done [#allocation9], 2048
    $region65: #{tpu_custom_call.1} parent=1 // pred_fallthru
      _
    // Predicated region
    $region66: #{tpu_custom_call.1} parent=1 // pred_check
      _
    $region67: #{tpu_custom_call.1} parent=1 // pred_check_branch
      %119 = sbr.rel (0) target = $region69
    $region68: #{tpu_custom_call.1} parent=1 // pred_region
      %120 = dma.done [#allocation12], 1024
    $region69: #{tpu_custom_call.1} parent=1 // pred_fallthru
      _
    %v122 = vld [vmem:[#allocation2] sm:$0xff]
    %v123 = vld [vmem:[#allocation2 + $0x8] sm:$0xff]
    %v124 = vpack.c.bf16 %v123, %v122
    %v125 = vld [vmem:[#allocation5] sm:$0xff]
    %v126 = vld [vmem:[#allocation5 + $0x8] sm:$0xff]
    %v127 = vld [vmem:[#allocation5 + $0x10] sm:$0xff]
    %v128 = vld [vmem:[#allocation5 + $0x18] sm:$0xff]
    %v129 = vld [vmem:[#allocation5 + $0x20] sm:$0xff]
    %v130 = vld [vmem:[#allocation5 + $0x28] sm:$0xff]
    %v131 = vld [vmem:[#allocation5 + $0x30] sm:$0xff]
    %v132 = vld [vmem:[#allocation5 + $0x38] sm:$0xff]
    %v133 = vld [vmem:[#allocation5 + $0x40] sm:$0xff]
    %v134 = vld [vmem:[#allocation5 + $0x48] sm:$0xff]
    %v135 = vld [vmem:[#allocation5 + $0x50] sm:$0xff]
    %v136 = vld [vmem:[#allocation5 + $0x58] sm:$0xff]
    %v137 = vld [vmem:[#allocation5 + $0x60] sm:$0xff]
    %v138 = vld [vmem:[#allocation5 + $0x68] sm:$0xff]
    %v139 = vld [vmem:[#allocation5 + $0x70] sm:$0xff]
    %v140 = vld [vmem:[#allocation5 + $0x78] sm:$0xff]
    %v141 = vld [vmem:[%s2] sm:$0xf]
    %v143 = vlaneseq
    %v144 = vshrl.u32 %v143, 7
    %v145 = vsub.s32 0, %v144
    %v146 = vrot.slane %v141, %v145
    %v147 = vlaneseq
    %v148 = vshrl.u32 %v147, 7
    %v149 = vsub.s32 1, %v148
    %v150 = vrot.slane %v141, %v149
    %v151 = vlaneseq
    %v152 = vshrl.u32 %v151, 7
    %v153 = vsub.s32 2, %v152
    %v154 = vrot.slane %v141, %v153
    %v155 = vlaneseq
    %v156 = vshrl.u32 %v155, 7
    %v157 = vsub.s32 3, %v156
    %v158 = vrot.slane %v141, %v157
    %v179 = vunpack.c.l.b16 %v125
    %v180 = vunpack.c.h.b16 %v125
    %v181 = vunpack.c.l.b16 %v126
    %v182 = vunpack.c.h.b16 %v126
    %v183 = vunpack.c.l.b16 %v127
    %v184 = vunpack.c.h.b16 %v127
    %v185 = vunpack.c.l.b16 %v128
    %v186 = vunpack.c.h.b16 %v128
    %v187 = vunpack.c.l.b16 %v129
    %v188 = vunpack.c.h.b16 %v129
    %v189 = vunpack.c.l.b16 %v130
    %v190 = vunpack.c.h.b16 %v130
    %v191 = vunpack.c.l.b16 %v131
    %v192 = vunpack.c.h.b16 %v131
    %v193 = vunpack.c.l.b16 %v132
    %v194 = vunpack.c.h.b16 %v132
    %v195 = vunpack.c.l.b16 %v133
    %v196 = vunpack.c.h.b16 %v133
    %v197 = vunpack.c.l.b16 %v134
    %v198 = vunpack.c.h.b16 %v134
    %v199 = vunpack.c.l.b16 %v135
    %v200 = vunpack.c.h.b16 %v135
    %v201 = vunpack.c.l.b16 %v136
    %v202 = vunpack.c.h.b16 %v136
    %v203 = vunpack.c.l.b16 %v137
    %v204 = vunpack.c.h.b16 %v137
    %v205 = vunpack.c.l.b16 %v138
    %v206 = vunpack.c.h.b16 %v138
    %v207 = vunpack.c.l.b16 %v139
    %v208 = vunpack.c.h.b16 %v139
    %v209 = vunpack.c.l.b16 %v140
    %v210 = vunpack.c.h.b16 %v140
    %v211 = vpack.c.b16 %v183, %v179
    %v212 = vpack.c.b16 %v184, %v180
    %v213 = vpack.c.b16 %v185, %v181
    %v214 = vpack.c.b16 %v186, %v182
    %v215 = vpack.c.b16 %v191, %v187
    %v216 = vpack.c.b16 %v192, %v188
    %v217 = vpack.c.b16 %v193, %v189
    %v218 = vpack.c.b16 %v194, %v190
    %v219 = vpack.c.b16 %v199, %v195
    %v220 = vpack.c.b16 %v200, %v196
    %v221 = vpack.c.b16 %v201, %v197
    %v222 = vpack.c.b16 %v202, %v198
    %v223 = vpack.c.b16 %v207, %v203
    %v224 = vpack.c.b16 %v208, %v204
    %v225 = vpack.c.b16 %v209, %v205
    %v226 = vpack.c.b16 %v210, %v206
    %vm243 = vcmask 523264
    %v245 = vsel %vm243, %v124, 0
    %247 = vmatprep.subr.bf16.mxu0 %v212
    %248 = vmatpush1.bf16.msra.mxu0 %v211
    %249 = vmatprep.subr.bf16.mxu0 %v216
    %250 = vmatpush1.bf16.msra.mxu0 %v215
    %251 = vmatprep.subr.bf16.mxu0 %v220
    %252 = vmatpush1.bf16.msra.mxu0 %v219
    %253 = vmatprep.subr.bf16.mxu0 %v224
    %254 = vmatpush1.bf16.msra.mxu0 %v223
    %255 = vmatprep.subr.bf16.mxu0 0
    %256 = vmatpush1.bf16.msra.mxu0 0
    %257 = vmatprep.subr.bf16.mxu0 0
    %258 = vmatpush1.bf16.msra.mxu0 0
    %259 = vmatprep.subr.bf16.mxu0 0
    %260 = vmatpush1.bf16.msra.mxu0 0
    %261 = vmatprep.subr.bf16.mxu0 0
    %262 = vmatpush1.bf16.msra.mxu0 0
    %263 = vmatprep.subr.bf16.mxu0 0
    %264 = vmatpush1.bf16.msra.mxu0 0
    %265 = vmatprep.subr.bf16.mxu0 0
    %266 = vmatpush1.bf16.msra.mxu0 0
    %267 = vmatprep.subr.bf16.mxu0 0
    %268 = vmatpush1.bf16.msra.mxu0 0
    %269 = vmatprep.subr.bf16.mxu0 0
    %270 = vmatpush1.bf16.msra.mxu0 0
    %271 = vmatprep.subr.bf16.mxu0 0
    %272 = vmatpush1.bf16.msra.mxu0 0
    %273 = vmatprep.subr.bf16.mxu0 0
    %274 = vmatpush1.bf16.msra.mxu0 0
    %275 = vmatprep.subr.bf16.mxu0 0
    %276 = vmatpush1.bf16.msra.mxu0 0
    %277 = vmatprep.subr.bf16.mxu0 0
    %278 = vmatpush1.bf16.msra.mxu0 0
    %279 = vmatprep.mubr.bf16.mxu0 0
    %280 = vmatmul.mubr.bf16.gmra.mrb[0].mxu0 %v245
    %v281 = vpop.f32.mrb[0].mxu0
    %v282 = vadd.f32 %v146, %v281
    %v283 = vpop.f32.mrb[0].mxu0
    %v284 = vadd.f32 %v150, %v283
    %v285 = vpop.f32.mrb[0].mxu0
    %v286 = vadd.f32 %v146, %v285
    %v287 = vpop.f32.mrb[0].mxu0
    %v288 = vadd.f32 %v150, %v287
    %289 = vdwg.mxu0
    %290 = vmatprep.subr.bf16.mxu0 %v214
    %291 = vmatpush1.bf16.msra.mxu0 %v213
    %292 = vmatprep.subr.bf16.mxu0 %v218
    %293 = vmatpush1.bf16.msra.mxu0 %v217
    %294 = vmatprep.subr.bf16.mxu0 %v222
    %295 = vmatpush1.bf16.msra.mxu0 %v221
    %296 = vmatprep.subr.bf16.mxu0 %v226
    %297 = vmatpush1.bf16.msra.mxu0 %v225
    %298 = vmatprep.subr.bf16.mxu0 0
    %299 = vmatpush1.bf16.msra.mxu0 0
    %300 = vmatprep.subr.bf16.mxu0 0
    %301 = vmatpush1.bf16.msra.mxu0 0
    %302 = vmatprep.subr.bf16.mxu0 0
    %303 = vmatpush1.bf16.msra.mxu0 0
    %304 = vmatprep.subr.bf16.mxu0 0
    %305 = vmatpush1.bf16.msra.mxu0 0
    %306 = vmatprep.subr.bf16.mxu0 0
    %307 = vmatpush1.bf16.msra.mxu0 0
    %308 = vmatprep.subr.bf16.mxu0 0
    %309 = vmatpush1.bf16.msra.mxu0 0
    %310 = vmatprep.subr.bf16.mxu0 0
    %311 = vmatpush1.bf16.msra.mxu0 0
    %312 = vmatprep.subr.bf16.mxu0 0
    %313 = vmatpush1.bf16.msra.mxu0 0
    %314 = vmatprep.subr.bf16.mxu0 0
    %315 = vmatpush1.bf16.msra.mxu0 0
    %316 = vmatprep.subr.bf16.mxu0 0
    %317 = vmatpush1.bf16.msra.mxu0 0
    %318 = vmatprep.subr.bf16.mxu0 0
    %319 = vmatpush1.bf16.msra.mxu0 0
    %320 = vmatprep.subr.bf16.mxu0 0
    %321 = vmatpush1.bf16.msra.mxu0 0
    %322 = vmatprep.mubr.bf16.mxu0 0
    %323 = vmatmul.mubr.bf16.gmra.mrb[0].mxu0 %v245
    %v324 = vpop.f32.mrb[0].mxu0
    %v325 = vadd.f32 %v154, %v324
    %v326 = vpop.f32.mrb[0].mxu0
    %v327 = vadd.f32 %v158, %v326
    %v328 = vpop.f32.mrb[0].mxu0
    %v329 = vadd.f32 %v154, %v328
    %v330 = vpop.f32.mrb[0].mxu0
    %v331 = vadd.f32 %v158, %v330
    %332 = vdwg.mxu0
    %v333 = vmax.f32 %v282, 0.0
    %v334 = vmax.f32 %v284, 0.0
    %v335 = vmax.f32 %v325, 0.0
    %v336 = vmax.f32 %v327, 0.0
    %v337 = vmax.f32 %v286, 0.0
    %v338 = vmax.f32 %v288, 0.0
    %v339 = vmax.f32 %v329, 0.0
    %v340 = vmax.f32 %v331, 0.0
    %v341 = vpack.c.bf16 %v337, %v333
    %v342 = vpack.c.bf16 %v338, %v334
    %v343 = vpack.c.bf16 %v339, %v335
    %v344 = vpack.c.bf16 %v340, %v336
    %v345 = vld [vmem:[#allocation7] sm:$0xff]
    %v346 = vld [vmem:[#allocation7 + $0x8] sm:$0xff]
    %v347 = vld [vmem:[#allocation7 + $0x10] sm:$0xff]
    %v348 = vld [vmem:[#allocation7 + $0x18] sm:$0xff]
    %v349 = vld [vmem:[#allocation7 + $0x20] sm:$0xff]
    %v350 = vld [vmem:[#allocation7 + $0x28] sm:$0xff]
    %v351 = vld [vmem:[#allocation7 + $0x30] sm:$0xff]
    %v352 = vld [vmem:[#allocation7 + $0x38] sm:$0xff]
    %v353 = vld [vmem:[#allocation7 + $0x40] sm:$0xff]
    %v354 = vld [vmem:[#allocation7 + $0x48] sm:$0xff]
    %v355 = vld [vmem:[#allocation7 + $0x50] sm:$0xff]
    %v356 = vld [vmem:[#allocation7 + $0x58] sm:$0xff]
    %v357 = vld [vmem:[#allocation7 + $0x60] sm:$0xff]
    %v358 = vld [vmem:[#allocation7 + $0x68] sm:$0xff]
    %v359 = vld [vmem:[#allocation7 + $0x70] sm:$0xff]
    %v360 = vld [vmem:[#allocation7 + $0x78] sm:$0xff]
    %v361 = vld [vmem:[#allocation7 + $0x80] sm:$0xff]
    %v362 = vld [vmem:[#allocation7 + $0x88] sm:$0xff]
    %v363 = vld [vmem:[#allocation7 + $0x90] sm:$0xff]
    %v364 = vld [vmem:[#allocation7 + $0x98] sm:$0xff]
    %v365 = vld [vmem:[#allocation7 + $0xa0] sm:$0xff]
    %v366 = vld [vmem:[#allocation7 + $0xa8] sm:$0xff]
    %v367 = vld [vmem:[#allocation7 + $0xb0] sm:$0xff]
    %v368 = vld [vmem:[#allocation7 + $0xb8] sm:$0xff]
    %v369 = vld [vmem:[#allocation7 + $0xc0] sm:$0xff]
    %v370 = vld [vmem:[#allocation7 + $0xc8] sm:$0xff]
    %v371 = vld [vmem:[#allocation7 + $0xd0] sm:$0xff]
    %v372 = vld [vmem:[#allocation7 + $0xd8] sm:$0xff]
    %v373 = vld [vmem:[#allocation7 + $0xe0] sm:$0xff]
    %v374 = vld [vmem:[#allocation7 + $0xe8] sm:$0xff]
    %v375 = vld [vmem:[#allocation7 + $0xf0] sm:$0xff]
    %v376 = vld [vmem:[#allocation7 + $0xf8] sm:$0xff]
    %v377 = vld [vmem:[#allocation7 + $0x100] sm:$0xff]
    %v378 = vld [vmem:[#allocation7 + $0x108] sm:$0xff]
    %v379 = vld [vmem:[#allocation7 + $0x110] sm:$0xff]
    %v380 = vld [vmem:[#allocation7 + $0x118] sm:$0xff]
    %v381 = vld [vmem:[#allocation7 + $0x120] sm:$0xff]
    %v382 = vld [vmem:[#allocation7 + $0x128] sm:$0xff]
    %v383 = vld [vmem:[#allocation7 + $0x130] sm:$0xff]
    %v384 = vld [vmem:[#allocation7 + $0x138] sm:$0xff]
    %v385 = vld [vmem:[#allocation7 + $0x140] sm:$0xff]
    %v386 = vld [vmem:[#allocation7 + $0x148] sm:$0xff]
    %v387 = vld [vmem:[#allocation7 + $0x150] sm:$0xff]
    %v388 = vld [vmem:[#allocation7 + $0x158] sm:$0xff]
    %v389 = vld [vmem:[#allocation7 + $0x160] sm:$0xff]
    %v390 = vld [vmem:[#allocation7 + $0x168] sm:$0xff]
    %v391 = vld [vmem:[#allocation7 + $0x170] sm:$0xff]
    %v392 = vld [vmem:[#allocation7 + $0x178] sm:$0xff]
    %v393 = vld [vmem:[#allocation7 + $0x180] sm:$0xff]
    %v394 = vld [vmem:[#allocation7 + $0x188] sm:$0xff]
    %v395 = vld [vmem:[#allocation7 + $0x190] sm:$0xff]
    %v396 = vld [vmem:[#allocation7 + $0x198] sm:$0xff]
    %v397 = vld [vmem:[#allocation7 + $0x1a0] sm:$0xff]
    %v398 = vld [vmem:[#allocation7 + $0x1a8] sm:$0xff]
    %v399 = vld [vmem:[#allocation7 + $0x1b0] sm:$0xff]
    %v400 = vld [vmem:[#allocation7 + $0x1b8] sm:$0xff]
    %v401 = vld [vmem:[#allocation7 + $0x1c0] sm:$0xff]
    %v402 = vld [vmem:[#allocation7 + $0x1c8] sm:$0xff]
    %v403 = vld [vmem:[#allocation7 + $0x1d0] sm:$0xff]
    %v404 = vld [vmem:[#allocation7 + $0x1d8] sm:$0xff]
    %v405 = vld [vmem:[#allocation7 + $0x1e0] sm:$0xff]
    %v406 = vld [vmem:[#allocation7 + $0x1e8] sm:$0xff]
    %v407 = vld [vmem:[#allocation7 + $0x1f0] sm:$0xff]
    %v408 = vld [vmem:[#allocation7 + $0x1f8] sm:$0xff]
    %v409 = vld [vmem:[#allocation7 + $0x200] sm:$0xff]
    %v410 = vld [vmem:[#allocation7 + $0x208] sm:$0xff]
    %v411 = vld [vmem:[#allocation7 + $0x210] sm:$0xff]
    %v412 = vld [vmem:[#allocation7 + $0x218] sm:$0xff]
    %v413 = vld [vmem:[#allocation7 + $0x220] sm:$0xff]
    %v414 = vld [vmem:[#allocation7 + $0x228] sm:$0xff]
    %v415 = vld [vmem:[#allocation7 + $0x230] sm:$0xff]
    %v416 = vld [vmem:[#allocation7 + $0x238] sm:$0xff]
    %v417 = vld [vmem:[#allocation7 + $0x240] sm:$0xff]
    %v418 = vld [vmem:[#allocation7 + $0x248] sm:$0xff]
    %v419 = vld [vmem:[#allocation7 + $0x250] sm:$0xff]
    %v420 = vld [vmem:[#allocation7 + $0x258] sm:$0xff]
    %v421 = vld [vmem:[#allocation7 + $0x260] sm:$0xff]
    %v422 = vld [vmem:[#allocation7 + $0x268] sm:$0xff]
    %v423 = vld [vmem:[#allocation7 + $0x270] sm:$0xff]
    %v424 = vld [vmem:[#allocation7 + $0x278] sm:$0xff]
    %v425 = vld [vmem:[#allocation7 + $0x280] sm:$0xff]
    %v426 = vld [vmem:[#allocation7 + $0x288] sm:$0xff]
    %v427 = vld [vmem:[#allocation7 + $0x290] sm:$0xff]
    %v428 = vld [vmem:[#allocation7 + $0x298] sm:$0xff]
    %v429 = vld [vmem:[#allocation7 + $0x2a0] sm:$0xff]
    %v430 = vld [vmem:[#allocation7 + $0x2a8] sm:$0xff]
    %v431 = vld [vmem:[#allocation7 + $0x2b0] sm:$0xff]
    %v432 = vld [vmem:[#allocation7 + $0x2b8] sm:$0xff]
    %v433 = vld [vmem:[#allocation7 + $0x2c0] sm:$0xff]
    %v434 = vld [vmem:[#allocation7 + $0x2c8] sm:$0xff]
    %v435 = vld [vmem:[#allocation7 + $0x2d0] sm:$0xff]
    %v436 = vld [vmem:[#allocation7 + $0x2d8] sm:$0xff]
    %v437 = vld [vmem:[#allocation7 + $0x2e0] sm:$0xff]
    %v438 = vld [vmem:[#allocation7 + $0x2e8] sm:$0xff]
    %v439 = vld [vmem:[#allocation7 + $0x2f0] sm:$0xff]
    %v440 = vld [vmem:[#allocation7 + $0x2f8] sm:$0xff]
    %v441 = vld [vmem:[#allocation7 + $0x300] sm:$0xff]
    %v442 = vld [vmem:[#allocation7 + $0x308] sm:$0xff]
    %v443 = vld [vmem:[#allocation7 + $0x310] sm:$0xff]
    %v444 = vld [vmem:[#allocation7 + $0x318] sm:$0xff]
    %v445 = vld [vmem:[#allocation7 + $0x320] sm:$0xff]
    %v446 = vld [vmem:[#allocation7 + $0x328] sm:$0xff]
    %v447 = vld [vmem:[#allocation7 + $0x330] sm:$0xff]
    %v448 = vld [vmem:[#allocation7 + $0x338] sm:$0xff]
    %v449 = vld [vmem:[#allocation7 + $0x340] sm:$0xff]
    %v450 = vld [vmem:[#allocation7 + $0x348] sm:$0xff]
    %v451 = vld [vmem:[#allocation7 + $0x350] sm:$0xff]
    %v452 = vld [vmem:[#allocation7 + $0x358] sm:$0xff]
    %v453 = vld [vmem:[#allocation7 + $0x360] sm:$0xff]
    %v454 = vld [vmem:[#allocation7 + $0x368] sm:$0xff]
    %v455 = vld [vmem:[#allocation7 + $0x370] sm:$0xff]
    %v456 = vld [vmem:[#allocation7 + $0x378] sm:$0xff]
    %v457 = vld [vmem:[#allocation7 + $0x380] sm:$0xff]
    %v458 = vld [vmem:[#allocation7 + $0x388] sm:$0xff]
    %v459 = vld [vmem:[#allocation7 + $0x390] sm:$0xff]
    %v460 = vld [vmem:[#allocation7 + $0x398] sm:$0xff]
    %v461 = vld [vmem:[#allocation7 + $0x3a0] sm:$0xff]
    %v462 = vld [vmem:[#allocation7 + $0x3a8] sm:$0xff]
    %v463 = vld [vmem:[#allocation7 + $0x3b0] sm:$0xff]
    %v464 = vld [vmem:[#allocation7 + $0x3b8] sm:$0xff]
    %v465 = vld [vmem:[#allocation7 + $0x3c0] sm:$0xff]
    %v466 = vld [vmem:[#allocation7 + $0x3c8] sm:$0xff]
    %v467 = vld [vmem:[#allocation7 + $0x3d0] sm:$0xff]
    %v468 = vld [vmem:[#allocation7 + $0x3d8] sm:$0xff]
    %v469 = vld [vmem:[#allocation7 + $0x3e0] sm:$0xff]
    %v470 = vld [vmem:[#allocation7 + $0x3e8] sm:$0xff]
    %v471 = vld [vmem:[#allocation7 + $0x3f0] sm:$0xff]
    %v472 = vld [vmem:[#allocation7 + $0x3f8] sm:$0xff]
    %v473 = vld [vmem:[%s4] sm:$0xf]
    %v475 = vlaneseq
    %v476 = vshrl.u32 %v475, 7
    %v477 = vsub.s32 0, %v476
    %v478 = vrot.slane %v473, %v477
    %v479 = vlaneseq
    %v480 = vshrl.u32 %v479, 7
    %v481 = vsub.s32 1, %v480
    %v482 = vrot.slane %v473, %v481
    %v483 = vlaneseq
    %v484 = vshrl.u32 %v483, 7
    %v485 = vsub.s32 2, %v484
    %v486 = vrot.slane %v473, %v485
    %v487 = vlaneseq
    %v488 = vshrl.u32 %v487, 7
    %v489 = vsub.s32 3, %v488
    %v490 = vrot.slane %v473, %v489
    %v623 = vunpack.c.l.b16 %v345
    %v624 = vunpack.c.h.b16 %v345
    %v625 = vunpack.c.l.b16 %v346
    %v626 = vunpack.c.h.b16 %v346
    %v627 = vunpack.c.l.b16 %v347
    %v628 = vunpack.c.h.b16 %v347
    %v629 = vunpack.c.l.b16 %v348
    %v630 = vunpack.c.h.b16 %v348
    %v631 = vunpack.c.l.b16 %v349
    %v632 = vunpack.c.h.b16 %v349
    %v633 = vunpack.c.l.b16 %v350
    %v634 = vunpack.c.h.b16 %v350
    %v635 = vunpack.c.l.b16 %v351
    %v636 = vunpack.c.h.b16 %v351
    %v637 = vunpack.c.l.b16 %v352
    %v638 = vunpack.c.h.b16 %v352
    %v639 = vunpack.c.l.b16 %v353
    %v640 = vunpack.c.h.b16 %v353
    %v641 = vunpack.c.l.b16 %v354
    %v642 = vunpack.c.h.b16 %v354
    %v643 = vunpack.c.l.b16 %v355
    %v644 = vunpack.c.h.b16 %v355
    %v645 = vunpack.c.l.b16 %v356
    %v646 = vunpack.c.h.b16 %v356
    %v647 = vunpack.c.l.b16 %v357
    %v648 = vunpack.c.h.b16 %v357
    %v649 = vunpack.c.l.b16 %v358
    %v650 = vunpack.c.h.b16 %v358
    %v651 = vunpack.c.l.b16 %v359
    %v652 = vunpack.c.h.b16 %v359
    %v653 = vunpack.c.l.b16 %v360
    %v654 = vunpack.c.h.b16 %v360
    %v655 = vunpack.c.l.b16 %v361
    %v656 = vunpack.c.h.b16 %v361
    %v657 = vunpack.c.l.b16 %v362
    %v658 = vunpack.c.h.b16 %v362
    %v659 = vunpack.c.l.b16 %v363
    %v660 = vunpack.c.h.b16 %v363
    %v661 = vunpack.c.l.b16 %v364
    %v662 = vunpack.c.h.b16 %v364
    %v663 = vunpack.c.l.b16 %v365
    %v664 = vunpack.c.h.b16 %v365
    %v665 = vunpack.c.l.b16 %v366
    %v666 = vunpack.c.h.b16 %v366
    %v667 = vunpack.c.l.b16 %v367
    %v668 = vunpack.c.h.b16 %v367
    %v669 = vunpack.c.l.b16 %v368
    %v670 = vunpack.c.h.b16 %v368
    %v671 = vunpack.c.l.b16 %v369
    %v672 = vunpack.c.h.b16 %v369
    %v673 = vunpack.c.l.b16 %v370
    %v674 = vunpack.c.h.b16 %v370
    %v675 = vunpack.c.l.b16 %v371
    %v676 = vunpack.c.h.b16 %v371
    %v677 = vunpack.c.l.b16 %v372
    %v678 = vunpack.c.h.b16 %v372
    %v679 = vunpack.c.l.b16 %v373
    %v680 = vunpack.c.h.b16 %v373
    %v681 = vunpack.c.l.b16 %v374
    %v682 = vunpack.c.h.b16 %v374
    %v683 = vunpack.c.l.b16 %v375
    %v684 = vunpack.c.h.b16 %v375
    %v685 = vunpack.c.l.b16 %v376
    %v686 = vunpack.c.h.b16 %v376
    %v687 = vunpack.c.l.b16 %v377
    %v688 = vunpack.c.h.b16 %v377
    %v689 = vunpack.c.l.b16 %v378
    %v690 = vunpack.c.h.b16 %v378
    %v691 = vunpack.c.l.b16 %v379
    %v692 = vunpack.c.h.b16 %v379
    %v693 = vunpack.c.l.b16 %v380
    %v694 = vunpack.c.h.b16 %v380
    %v695 = vunpack.c.l.b16 %v381
    %v696 = vunpack.c.h.b16 %v381
    %v697 = vunpack.c.l.b16 %v382
    %v698 = vunpack.c.h.b16 %v382
    %v699 = vunpack.c.l.b16 %v383
    %v700 = vunpack.c.h.b16 %v383
    %v701 = vunpack.c.l.b16 %v384
    %v702 = vunpack.c.h.b16 %v384
    %v703 = vunpack.c.l.b16 %v385
    %v704 = vunpack.c.h.b16 %v385
    %v705 = vunpack.c.l.b16 %v386
    %v706 = vunpack.c.h.b16 %v386
    %v707 = vunpack.c.l.b16 %v387
    %v708 = vunpack.c.h.b16 %v387
    %v709 = vunpack.c.l.b16 %v388
    %v710 = vunpack.c.h.b16 %v388
    %v711 = vunpack.c.l.b16 %v389
    %v712 = vunpack.c.h.b16 %v389
    %v713 = vunpack.c.l.b16 %v390
    %v714 = vunpack.c.h.b16 %v390
    %v715 = vunpack.c.l.b16 %v391
    %v716 = vunpack.c.h.b16 %v391
    %v717 = vunpack.c.l.b16 %v392
    %v718 = vunpack.c.h.b16 %v392
    %v719 = vunpack.c.l.b16 %v393
    %v720 = vunpack.c.h.b16 %v393
    %v721 = vunpack.c.l.b16 %v394
    %v722 = vunpack.c.h.b16 %v394
    %v723 = vunpack.c.l.b16 %v395
    %v724 = vunpack.c.h.b16 %v395
    %v725 = vunpack.c.l.b16 %v396
    %v726 = vunpack.c.h.b16 %v396
    %v727 = vunpack.c.l.b16 %v397
    %v728 = vunpack.c.h.b16 %v397
    %v729 = vunpack.c.l.b16 %v398
    %v730 = vunpack.c.h.b16 %v398
    %v731 = vunpack.c.l.b16 %v399
    %v732 = vunpack.c.h.b16 %v399
    %v733 = vunpack.c.l.b16 %v400
    %v734 = vunpack.c.h.b16 %v400
    %v735 = vunpack.c.l.b16 %v401
    %v736 = vunpack.c.h.b16 %v401
    %v737 = vunpack.c.l.b16 %v402
    %v738 = vunpack.c.h.b16 %v402
    %v739 = vunpack.c.l.b16 %v403
    %v740 = vunpack.c.h.b16 %v403
    %v741 = vunpack.c.l.b16 %v404
    %v742 = vunpack.c.h.b16 %v404
    %v743 = vunpack.c.l.b16 %v405
    %v744 = vunpack.c.h.b16 %v405
    %v745 = vunpack.c.l.b16 %v406
    %v746 = vunpack.c.h.b16 %v406
    %v747 = vunpack.c.l.b16 %v407
    %v748 = vunpack.c.h.b16 %v407
    %v749 = vunpack.c.l.b16 %v408
    %v750 = vunpack.c.h.b16 %v408
    %v751 = vunpack.c.l.b16 %v409
    %v752 = vunpack.c.h.b16 %v409
    %v753 = vunpack.c.l.b16 %v410
    %v754 = vunpack.c.h.b16 %v410
    %v755 = vunpack.c.l.b16 %v411
    %v756 = vunpack.c.h.b16 %v411
    %v757 = vunpack.c.l.b16 %v412
    %v758 = vunpack.c.h.b16 %v412
    %v759 = vunpack.c.l.b16 %v413
    %v760 = vunpack.c.h.b16 %v413
    %v761 = vunpack.c.l.b16 %v414
    %v762 = vunpack.c.h.b16 %v414
    %v763 = vunpack.c.l.b16 %v415
    %v764 = vunpack.c.h.b16 %v415
    %v765 = vunpack.c.l.b16 %v416
    %v766 = vunpack.c.h.b16 %v416
    %v767 = vunpack.c.l.b16 %v417
    %v768 = vunpack.c.h.b16 %v417
    %v769 = vunpack.c.l.b16 %v418
    %v770 = vunpack.c.h.b16 %v418
    %v771 = vunpack.c.l.b16 %v419
    %v772 = vunpack.c.h.b16 %v419
    %v773 = vunpack.c.l.b16 %v420
    %v774 = vunpack.c.h.b16 %v420
    %v775 = vunpack.c.l.b16 %v421
    %v776 = vunpack.c.h.b16 %v421
    %v777 = vunpack.c.l.b16 %v422
    %v778 = vunpack.c.h.b16 %v422
    %v779 = vunpack.c.l.b16 %v423
    %v780 = vunpack.c.h.b16 %v423
    %v781 = vunpack.c.l.b16 %v424
    %v782 = vunpack.c.h.b16 %v424
    %v783 = vunpack.c.l.b16 %v425
    %v784 = vunpack.c.h.b16 %v425
    %v785 = vunpack.c.l.b16 %v426
    %v786 = vunpack.c.h.b16 %v426
    %v787 = vunpack.c.l.b16 %v427
    %v788 = vunpack.c.h.b16 %v427
    %v789 = vunpack.c.l.b16 %v428
    %v790 = vunpack.c.h.b16 %v428
    %v791 = vunpack.c.l.b16 %v429
    %v792 = vunpack.c.h.b16 %v429
    %v793 = vunpack.c.l.b16 %v430
    %v794 = vunpack.c.h.b16 %v430
    %v795 = vunpack.c.l.b16 %v431
    %v796 = vunpack.c.h.b16 %v431
    %v797 = vunpack.c.l.b16 %v432
    %v798 = vunpack.c.h.b16 %v432
    %v799 = vunpack.c.l.b16 %v433
    %v800 = vunpack.c.h.b16 %v433
    %v801 = vunpack.c.l.b16 %v434
    %v802 = vunpack.c.h.b16 %v434
    %v803 = vunpack.c.l.b16 %v435
    %v804 = vunpack.c.h.b16 %v435
    %v805 = vunpack.c.l.b16 %v436
    %v806 = vunpack.c.h.b16 %v436
    %v807 = vunpack.c.l.b16 %v437
    %v808 = vunpack.c.h.b16 %v437
    %v809 = vunpack.c.l.b16 %v438
    %v810 = vunpack.c.h.b16 %v438
    %v811 = vunpack.c.l.b16 %v439
    %v812 = vunpack.c.h.b16 %v439
    %v813 = vunpack.c.l.b16 %v440
    %v814 = vunpack.c.h.b16 %v440
    %v815 = vunpack.c.l.b16 %v441
    %v816 = vunpack.c.h.b16 %v441
    %v817 = vunpack.c.l.b16 %v442
    %v818 = vunpack.c.h.b16 %v442
    %v819 = vunpack.c.l.b16 %v443
    %v820 = vunpack.c.h.b16 %v443
    %v821 = vunpack.c.l.b16 %v444
    %v822 = vunpack.c.h.b16 %v444
    %v823 = vunpack.c.l.b16 %v445
    %v824 = vunpack.c.h.b16 %v445
    %v825 = vunpack.c.l.b16 %v446
    %v826 = vunpack.c.h.b16 %v446
    %v827 = vunpack.c.l.b16 %v447
    %v828 = vunpack.c.h.b16 %v447
    %v829 = vunpack.c.l.b16 %v448
    %v830 = vunpack.c.h.b16 %v448
    %v831 = vunpack.c.l.b16 %v449
    %v832 = vunpack.c.h.b16 %v449
    %v833 = vunpack.c.l.b16 %v450
    %v834 = vunpack.c.h.b16 %v450
    %v835 = vunpack.c.l.b16 %v451
    %v836 = vunpack.c.h.b16 %v451
    %v837 = vunpack.c.l.b16 %v452
    %v838 = vunpack.c.h.b16 %v452
    %v839 = vunpack.c.l.b16 %v453
    %v840 = vunpack.c.h.b16 %v453
    %v841 = vunpack.c.l.b16 %v454
    %v842 = vunpack.c.h.b16 %v454
    %v843 = vunpack.c.l.b16 %v455
    %v844 = vunpack.c.h.b16 %v455
    %v845 = vunpack.c.l.b16 %v456
    %v846 = vunpack.c.h.b16 %v456
    %v847 = vunpack.c.l.b16 %v457
    %v848 = vunpack.c.h.b16 %v457
    %v849 = vunpack.c.l.b16 %v458
    %v850 = vunpack.c.h.b16 %v458
    %v851 = vunpack.c.l.b16 %v459
    %v852 = vunpack.c.h.b16 %v459
    %v853 = vunpack.c.l.b16 %v460
    %v854 = vunpack.c.h.b16 %v460
    %v855 = vunpack.c.l.b16 %v461
    %v856 = vunpack.c.h.b16 %v461
    %v857 = vunpack.c.l.b16 %v462
    %v858 = vunpack.c.h.b16 %v462
    %v859 = vunpack.c.l.b16 %v463
    %v860 = vunpack.c.h.b16 %v463
    %v861 = vunpack.c.l.b16 %v464
    %v862 = vunpack.c.h.b16 %v464
    %v863 = vunpack.c.l.b16 %v465
    %v864 = vunpack.c.h.b16 %v465
    %v865 = vunpack.c.l.b16 %v466
    %v866 = vunpack.c.h.b16 %v466
    %v867 = vunpack.c.l.b16 %v467
    %v868 = vunpack.c.h.b16 %v467
    %v869 = vunpack.c.l.b16 %v468
    %v870 = vunpack.c.h.b16 %v468
    %v871 = vunpack.c.l.b16 %v469
    %v872 = vunpack.c.h.b16 %v469
    %v873 = vunpack.c.l.b16 %v470
    %v874 = vunpack.c.h.b16 %v470
    %v875 = vunpack.c.l.b16 %v471
    %v876 = vunpack.c.h.b16 %v471
    %v877 = vunpack.c.l.b16 %v472
    %v878 = vunpack.c.h.b16 %v472
    %v879 = vpack.c.b16 %v627, %v623
    %v880 = vpack.c.b16 %v628, %v624
    %v881 = vpack.c.b16 %v629, %v625
    %v882 = vpack.c.b16 %v630, %v626
    %v883 = vpack.c.b16 %v635, %v631
    %v884 = vpack.c.b16 %v636, %v632
    %v885 = vpack.c.b16 %v637, %v633
    %v886 = vpack.c.b16 %v638, %v634
    %v887 = vpack.c.b16 %v643, %v639
    %v888 = vpack.c.b16 %v644, %v640
    %v889 = vpack.c.b16 %v645, %v641
    %v890 = vpack.c.b16 %v646, %v642
    %v891 = vpack.c.b16 %v651, %v647
    %v892 = vpack.c.b16 %v652, %v648
    %v893 = vpack.c.b16 %v653, %v649
    %v894 = vpack.c.b16 %v654, %v650
    %v895 = vpack.c.b16 %v659, %v655
    %v896 = vpack.c.b16 %v660, %v656
    %v897 = vpack.c.b16 %v661, %v657
    %v898 = vpack.c.b16 %v662, %v658
    %v899 = vpack.c.b16 %v667, %v663
    %v900 = vpack.c.b16 %v668, %v664
    %v901 = vpack.c.b16 %v669, %v665
    %v902 = vpack.c.b16 %v670, %v666
    %v903 = vpack.c.b16 %v675, %v671
    %v904 = vpack.c.b16 %v676, %v672
    %v905 = vpack.c.b16 %v677, %v673
    %v906 = vpack.c.b16 %v678, %v674
    %v907 = vpack.c.b16 %v683, %v679
    %v908 = vpack.c.b16 %v684, %v680
    %v909 = vpack.c.b16 %v685, %v681
    %v910 = vpack.c.b16 %v686, %v682
    %v911 = vpack.c.b16 %v691, %v687
    %v912 = vpack.c.b16 %v692, %v688
    %v913 = vpack.c.b16 %v693, %v689
    %v914 = vpack.c.b16 %v694, %v690
    %v915 = vpack.c.b16 %v699, %v695
    %v916 = vpack.c.b16 %v700, %v696
    %v917 = vpack.c.b16 %v701, %v697
    %v918 = vpack.c.b16 %v702, %v698
    %v919 = vpack.c.b16 %v707, %v703
    %v920 = vpack.c.b16 %v708, %v704
    %v921 = vpack.c.b16 %v709, %v705
    %v922 = vpack.c.b16 %v710, %v706
    %v923 = vpack.c.b16 %v715, %v711
    %v924 = vpack.c.b16 %v716, %v712
    %v925 = vpack.c.b16 %v717, %v713
    %v926 = vpack.c.b16 %v718, %v714
    %v927 = vpack.c.b16 %v723, %v719
    %v928 = vpack.c.b16 %v724, %v720
    %v929 = vpack.c.b16 %v725, %v721
    %v930 = vpack.c.b16 %v726, %v722
    %v931 = vpack.c.b16 %v731, %v727
    %v932 = vpack.c.b16 %v732, %v728
    %v933 = vpack.c.b16 %v733, %v729
    %v934 = vpack.c.b16 %v734, %v730
    %v935 = vpack.c.b16 %v739, %v735
    %v936 = vpack.c.b16 %v740, %v736
    %v937 = vpack.c.b16 %v741, %v737
    %v938 = vpack.c.b16 %v742, %v738
    %v939 = vpack.c.b16 %v747, %v743
    %v940 = vpack.c.b16 %v748, %v744
    %v941 = vpack.c.b16 %v749, %v745
    %v942 = vpack.c.b16 %v750, %v746
    %v943 = vpack.c.b16 %v755, %v751
    %v944 = vpack.c.b16 %v756, %v752
    %v945 = vpack.c.b16 %v757, %v753
    %v946 = vpack.c.b16 %v758, %v754
    %v947 = vpack.c.b16 %v763, %v759
    %v948 = vpack.c.b16 %v764, %v760
    %v949 = vpack.c.b16 %v765, %v761
    %v950 = vpack.c.b16 %v766, %v762
    %v951 = vpack.c.b16 %v771, %v767
    %v952 = vpack.c.b16 %v772, %v768
    %v953 = vpack.c.b16 %v773, %v769
    %v954 = vpack.c.b16 %v774, %v770
    %v955 = vpack.c.b16 %v779, %v775
    %v956 = vpack.c.b16 %v780, %v776
    %v957 = vpack.c.b16 %v781, %v777
    %v958 = vpack.c.b16 %v782, %v778
    %v959 = vpack.c.b16 %v787, %v783
    %v960 = vpack.c.b16 %v788, %v784
    %v961 = vpack.c.b16 %v789, %v785
    %v962 = vpack.c.b16 %v790, %v786
    %v963 = vpack.c.b16 %v795, %v791
    %v964 = vpack.c.b16 %v796, %v792
    %v965 = vpack.c.b16 %v797, %v793
    %v966 = vpack.c.b16 %v798, %v794
    %v967 = vpack.c.b16 %v803, %v799
    %v968 = vpack.c.b16 %v804, %v800
    %v969 = vpack.c.b16 %v805, %v801
    %v970 = vpack.c.b16 %v806, %v802
    %v971 = vpack.c.b16 %v811, %v807
    %v972 = vpack.c.b16 %v812, %v808
    %v973 = vpack.c.b16 %v813, %v809
    %v974 = vpack.c.b16 %v814, %v810
    %v975 = vpack.c.b16 %v819, %v815
    %v976 = vpack.c.b16 %v820, %v816
    %v977 = vpack.c.b16 %v821, %v817
    %v978 = vpack.c.b16 %v822, %v818
    %v979 = vpack.c.b16 %v827, %v823
    %v980 = vpack.c.b16 %v828, %v824
    %v981 = vpack.c.b16 %v829, %v825
    %v982 = vpack.c.b16 %v830, %v826
    %v983 = vpack.c.b16 %v835, %v831
    %v984 = vpack.c.b16 %v836, %v832
    %v985 = vpack.c.b16 %v837, %v833
    %v986 = vpack.c.b16 %v838, %v834
    %v987 = vpack.c.b16 %v843, %v839
    %v988 = vpack.c.b16 %v844, %v840
    %v989 = vpack.c.b16 %v845, %v841
    %v990 = vpack.c.b16 %v846, %v842
    %v991 = vpack.c.b16 %v851, %v847
    %v992 = vpack.c.b16 %v852, %v848
    %v993 = vpack.c.b16 %v853, %v849
    %v994 = vpack.c.b16 %v854, %v850
    %v995 = vpack.c.b16 %v859, %v855
    %v996 = vpack.c.b16 %v860, %v856
    %v997 = vpack.c.b16 %v861, %v857
    %v998 = vpack.c.b16 %v862, %v858
    %v999 = vpack.c.b16 %v867, %v863
    %v1000 = vpack.c.b16 %v868, %v864
    %v1001 = vpack.c.b16 %v869, %v865
    %v1002 = vpack.c.b16 %v870, %v866
    %v1003 = vpack.c.b16 %v875, %v871
    %v1004 = vpack.c.b16 %v876, %v872
    %v1005 = vpack.c.b16 %v877, %v873
    %v1006 = vpack.c.b16 %v878, %v874
    %1135 = vmatprep.subr.bf16.mxu0 %v880
    %1136 = vmatpush1.bf16.msra.mxu0 %v879
    %1137 = vmatprep.subr.bf16.mxu0 %v884
    %1138 = vmatpush1.bf16.msra.mxu0 %v883
    %1139 = vmatprep.subr.bf16.mxu0 %v888
    %1140 = vmatpush1.bf16.msra.mxu0 %v887
    %1141 = vmatprep.subr.bf16.mxu0 %v892
    %1142 = vmatpush1.bf16.msra.mxu0 %v891
    %1143 = vmatprep.subr.bf16.mxu0 %v896
    %1144 = vmatpush1.bf16.msra.mxu0 %v895
    %1145 = vmatprep.subr.bf16.mxu0 %v900
    %1146 = vmatpush1.bf16.msra.mxu0 %v899
    %1147 = vmatprep.subr.bf16.mxu0 %v904
    %1148 = vmatpush1.bf16.msra.mxu0 %v903
    %1149 = vmatprep.subr.bf16.mxu0 %v908
    %1150 = vmatpush1.bf16.msra.mxu0 %v907
    %1151 = vmatprep.subr.bf16.mxu0 %v912
    %1152 = vmatpush1.bf16.msra.mxu0 %v911
    %1153 = vmatprep.subr.bf16.mxu0 %v916
    %1154 = vmatpush1.bf16.msra.mxu0 %v915
    %1155 = vmatprep.subr.bf16.mxu0 %v920
    %1156 = vmatpush1.bf16.msra.mxu0 %v919
    %1157 = vmatprep.subr.bf16.mxu0 %v924
    %1158 = vmatpush1.bf16.msra.mxu0 %v923
    %1159 = vmatprep.subr.bf16.mxu0 %v928
    %1160 = vmatpush1.bf16.msra.mxu0 %v927
    %1161 = vmatprep.subr.bf16.mxu0 %v932
    %1162 = vmatpush1.bf16.msra.mxu0 %v931
    %1163 = vmatprep.subr.bf16.mxu0 %v936
    %1164 = vmatpush1.bf16.msra.mxu0 %v935
    %1165 = vmatprep.subr.bf16.mxu0 %v940
    %1166 = vmatpush1.bf16.msra.mxu0 %v939
    %1167 = vmatprep.mubr.bf16.mxu0 %v342
    %1168 = vmatmul.mubr.bf16.gmra.mrb[0].mxu0 %v341
    %v1169 = vpop.f32.mrb[0].mxu0
    %v1170 = vadd.f32 %v478, %v1169
    %v1171 = vpop.f32.mrb[0].mxu0
    %v1172 = vadd.f32 %v482, %v1171
    %v1173 = vpop.f32.mrb[0].mxu0
    %v1174 = vadd.f32 %v478, %v1173
    %v1175 = vpop.f32.mrb[0].mxu0
    %v1176 = vadd.f32 %v482, %v1175
    %1177 = vdwg.mxu0
    %1178 = vmatprep.subr.bf16.mxu0 %v944
    %1179 = vmatpush1.bf16.msra.mxu0 %v943
    %1180 = vmatprep.subr.bf16.mxu0 %v948
    %1181 = vmatpush1.bf16.msra.mxu0 %v947
    %1182 = vmatprep.subr.bf16.mxu0 %v952
    %1183 = vmatpush1.bf16.msra.mxu0 %v951
    %1184 = vmatprep.subr.bf16.mxu0 %v956
    %1185 = vmatpush1.bf16.msra.mxu0 %v955
    %1186 = vmatprep.subr.bf16.mxu0 %v960
    %1187 = vmatpush1.bf16.msra.mxu0 %v959
    %1188 = vmatprep.subr.bf16.mxu0 %v964
    %1189 = vmatpush1.bf16.msra.mxu0 %v963
    %1190 = vmatprep.subr.bf16.mxu0 %v968
    %1191 = vmatpush1.bf16.msra.mxu0 %v967
    %1192 = vmatprep.subr.bf16.mxu0 %v972
    %1193 = vmatpush1.bf16.msra.mxu0 %v971
    %1194 = vmatprep.subr.bf16.mxu0 %v976
    %1195 = vmatpush1.bf16.msra.mxu0 %v975
    %1196 = vmatprep.subr.bf16.mxu0 %v980
    %1197 = vmatpush1.bf16.msra.mxu0 %v979
    %1198 = vmatprep.subr.bf16.mxu0 %v984
    %1199 = vmatpush1.bf16.msra.mxu0 %v983
    %1200 = vmatprep.subr.bf16.mxu0 %v988
    %1201 = vmatpush1.bf16.msra.mxu0 %v987
    %1202 = vmatprep.subr.bf16.mxu0 %v992
    %1203 = vmatpush1.bf16.msra.mxu0 %v991
    %1204 = vmatprep.subr.bf16.mxu0 %v996
    %1205 = vmatpush1.bf16.msra.mxu0 %v995
    %1206 = vmatprep.subr.bf16.mxu0 %v1000
    %1207 = vmatpush1.bf16.msra.mxu0 %v999
    %1208 = vmatprep.subr.bf16.mxu0 %v1004
    %1209 = vmatpush1.bf16.msra.mxu0 %v1003
    %1210 = vmatprep.mubr.bf16.mxu0 %v344
    %1211 = vmatmul.mubr.bf16.gmra.mrb[0].mxu0 %v343
    %v1212 = vpop.f32.mrb[0].mxu0
    %v1213 = vadd.f32 %v1170, %v1212
    %v1214 = vpop.f32.mrb[0].mxu0
    %v1215 = vadd.f32 %v1172, %v1214
    %v1216 = vpop.f32.mrb[0].mxu0
    %v1217 = vadd.f32 %v1174, %v1216
    %v1218 = vpop.f32.mrb[0].mxu0
    %v1219 = vadd.f32 %v1176, %v1218
    %1220 = vdwg.mxu0
    %1221 = vmatprep.subr.bf16.mxu0 %v882
    %1222 = vmatpush1.bf16.msra.mxu0 %v881
    %1223 = vmatprep.subr.bf16.mxu0 %v886
    %1224 = vmatpush1.bf16.msra.mxu0 %v885
    %1225 = vmatprep.subr.bf16.mxu0 %v890
    %1226 = vmatpush1.bf16.msra.mxu0 %v889
    %1227 = vmatprep.subr.bf16.mxu0 %v894
    %1228 = vmatpush1.bf16.msra.mxu0 %v893
    %1229 = vmatprep.subr.bf16.mxu0 %v898
    %1230 = vmatpush1.bf16.msra.mxu0 %v897
    %1231 = vmatprep.subr.bf16.mxu0 %v902
    %1232 = vmatpush1.bf16.msra.mxu0 %v901
    %1233 = vmatprep.subr.bf16.mxu0 %v906
    %1234 = vmatpush1.bf16.msra.mxu0 %v905
    %1235 = vmatprep.subr.bf16.mxu0 %v910
    %1236 = vmatpush1.bf16.msra.mxu0 %v909
    %1237 = vmatprep.subr.bf16.mxu0 %v914
    %1238 = vmatpush1.bf16.msra.mxu0 %v913
    %1239 = vmatprep.subr.bf16.mxu0 %v918
    %1240 = vmatpush1.bf16.msra.mxu0 %v917
    %1241 = vmatprep.subr.bf16.mxu0 %v922
    %1242 = vmatpush1.bf16.msra.mxu0 %v921
    %1243 = vmatprep.subr.bf16.mxu0 %v926
    %1244 = vmatpush1.bf16.msra.mxu0 %v925
    %1245 = vmatprep.subr.bf16.mxu0 %v930
    %1246 = vmatpush1.bf16.msra.mxu0 %v929
    %1247 = vmatprep.subr.bf16.mxu0 %v934
    %1248 = vmatpush1.bf16.msra.mxu0 %v933
    %1249 = vmatprep.subr.bf16.mxu0 %v938
    %1250 = vmatpush1.bf16.msra.mxu0 %v937
    %1251 = vmatprep.subr.bf16.mxu0 %v942
    %1252 = vmatpush1.bf16.msra.mxu0 %v941
    %1253 = vmatprep.mubr.bf16.mxu0 %v342
    %1254 = vmatmul.mubr.bf16.gmra.mrb[0].mxu0 %v341
    %v1255 = vpop.f32.mrb[0].mxu0
    %v1256 = vadd.f32 %v486, %v1255
    %v1257 = vpop.f32.mrb[0].mxu0
    %v1258 = vadd.f32 %v490, %v1257
    %v1259 = vpop.f32.mrb[0].mxu0
    %v1260 = vadd.f32 %v486, %v1259
    %v1261 = vpop.f32.mrb[0].mxu0
    %v1262 = vadd.f32 %v490, %v1261
    %1263 = vdwg.mxu0
    %1264 = vmatprep.subr.bf16.mxu0 %v946
    %1265 = vmatpush1.bf16.msra.mxu0 %v945
    %1266 = vmatprep.subr.bf16.mxu0 %v950
    %1267 = vmatpush1.bf16.msra.mxu0 %v949
    %1268 = vmatprep.subr.bf16.mxu0 %v954
    %1269 = vmatpush1.bf16.msra.mxu0 %v953
    %1270 = vmatprep.subr.bf16.mxu0 %v958
    %1271 = vmatpush1.bf16.msra.mxu0 %v957
    %1272 = vmatprep.subr.bf16.mxu0 %v962
    %1273 = vmatpush1.bf16.msra.mxu0 %v961
    %1274 = vmatprep.subr.bf16.mxu0 %v966
    %1275 = vmatpush1.bf16.msra.mxu0 %v965
    %1276 = vmatprep.subr.bf16.mxu0 %v970
    %1277 = vmatpush1.bf16.msra.mxu0 %v969
    %1278 = vmatprep.subr.bf16.mxu0 %v974
    %1279 = vmatpush1.bf16.msra.mxu0 %v973
    %1280 = vmatprep.subr.bf16.mxu0 %v978
    %1281 = vmatpush1.bf16.msra.mxu0 %v977
    %1282 = vmatprep.subr.bf16.mxu0 %v982
    %1283 = vmatpush1.bf16.msra.mxu0 %v981
    %1284 = vmatprep.subr.bf16.mxu0 %v986
    %1285 = vmatpush1.bf16.msra.mxu0 %v985
    %1286 = vmatprep.subr.bf16.mxu0 %v990
    %1287 = vmatpush1.bf16.msra.mxu0 %v989
    %1288 = vmatprep.subr.bf16.mxu0 %v994
    %1289 = vmatpush1.bf16.msra.mxu0 %v993
    %1290 = vmatprep.subr.bf16.mxu0 %v998
    %1291 = vmatpush1.bf16.msra.mxu0 %v997
    %1292 = vmatprep.subr.bf16.mxu0 %v1002
    %1293 = vmatpush1.bf16.msra.mxu0 %v1001
    %1294 = vmatprep.subr.bf16.mxu0 %v1006
    %1295 = vmatpush1.bf16.msra.mxu0 %v1005
    %1296 = vmatprep.mubr.bf16.mxu0 %v344
    %1297 = vmatmul.mubr.bf16.gmra.mrb[0].mxu0 %v343
    %v1298 = vpop.f32.mrb[0].mxu0
    %v1299 = vadd.f32 %v1256, %v1298
    %v1300 = vpop.f32.mrb[0].mxu0
    %v1301 = vadd.f32 %v1258, %v1300
    %v1302 = vpop.f32.mrb[0].mxu0
    %v1303 = vadd.f32 %v1260, %v1302
    %v1304 = vpop.f32.mrb[0].mxu0
    %v1305 = vadd.f32 %v1262, %v1304
    %1306 = vdwg.mxu0
    %v1307 = vmax.f32 %v1213, 0.0
    %v1308 = vmax.f32 %v1215, 0.0
    %v1309 = vmax.f32 %v1299, 0.0
    %v1310 = vmax.f32 %v1301, 0.0
    %v1311 = vmax.f32 %v1217, 0.0
    %v1312 = vmax.f32 %v1219, 0.0
    %v1313 = vmax.f32 %v1303, 0.0
    %v1314 = vmax.f32 %v1305, 0.0
    %v1315 = vpack.c.bf16 %v1311, %v1307
    %v1316 = vpack.c.bf16 %v1312, %v1308
    %v1317 = vpack.c.bf16 %v1313, %v1309
    %v1318 = vpack.c.bf16 %v1314, %v1310
    %v1319 = vld [vmem:[#allocation8] sm:$0xff]
    %v1320 = vld [vmem:[#allocation8 + $0x8] sm:$0xff]
    %v1321 = vld [vmem:[#allocation8 + $0x10] sm:$0xff]
    %v1322 = vld [vmem:[#allocation8 + $0x18] sm:$0xff]
    %v1323 = vld [vmem:[#allocation8 + $0x20] sm:$0xff]
    %v1324 = vld [vmem:[#allocation8 + $0x28] sm:$0xff]
    %v1325 = vld [vmem:[#allocation8 + $0x30] sm:$0xff]
    %v1326 = vld [vmem:[#allocation8 + $0x38] sm:$0xff]
    %v1327 = vld [vmem:[#allocation8 + $0x40] sm:$0xff]
    %v1328 = vld [vmem:[#allocation8 + $0x48] sm:$0xff]
    %v1329 = vld [vmem:[#allocation8 + $0x50] sm:$0xff]
    %v1330 = vld [vmem:[#allocation8 + $0x58] sm:$0xff]
    %v1331 = vld [vmem:[#allocation8 + $0x60] sm:$0xff]
    %v1332 = vld [vmem:[#allocation8 + $0x68] sm:$0xff]
    %v1333 = vld [vmem:[#allocation8 + $0x70] sm:$0xff]
    %v1334 = vld [vmem:[#allocation8 + $0x78] sm:$0xff]
    %v1335 = vld [vmem:[#allocation8 + $0x80] sm:$0xff]
    %v1336 = vld [vmem:[#allocation8 + $0x88] sm:$0xff]
    %v1337 = vld [vmem:[#allocation8 + $0x90] sm:$0xff]
    %v1338 = vld [vmem:[#allocation8 + $0x98] sm:$0xff]
    %v1339 = vld [vmem:[#allocation8 + $0xa0] sm:$0xff]
    %v1340 = vld [vmem:[#allocation8 + $0xa8] sm:$0xff]
    %v1341 = vld [vmem:[#allocation8 + $0xb0] sm:$0xff]
    %v1342 = vld [vmem:[#allocation8 + $0xb8] sm:$0xff]
    %v1343 = vld [vmem:[#allocation8 + $0xc0] sm:$0xff]
    %v1344 = vld [vmem:[#allocation8 + $0xc8] sm:$0xff]
    %v1345 = vld [vmem:[#allocation8 + $0xd0] sm:$0xff]
    %v1346 = vld [vmem:[#allocation8 + $0xd8] sm:$0xff]
    %v1347 = vld [vmem:[#allocation8 + $0xe0] sm:$0xff]
    %v1348 = vld [vmem:[#allocation8 + $0xe8] sm:$0xff]
    %v1349 = vld [vmem:[#allocation8 + $0xf0] sm:$0xff]
    %v1350 = vld [vmem:[#allocation8 + $0xf8] sm:$0xff]
    %v1351 = vld [vmem:[#allocation8 + $0x100] sm:$0xff]
    %v1352 = vld [vmem:[#allocation8 + $0x108] sm:$0xff]
    %v1353 = vld [vmem:[#allocation8 + $0x110] sm:$0xff]
    %v1354 = vld [vmem:[#allocation8 + $0x118] sm:$0xff]
    %v1355 = vld [vmem:[#allocation8 + $0x120] sm:$0xff]
    %v1356 = vld [vmem:[#allocation8 + $0x128] sm:$0xff]
    %v1357 = vld [vmem:[#allocation8 + $0x130] sm:$0xff]
    %v1358 = vld [vmem:[#allocation8 + $0x138] sm:$0xff]
    %v1359 = vld [vmem:[#allocation8 + $0x140] sm:$0xff]
    %v1360 = vld [vmem:[#allocation8 + $0x148] sm:$0xff]
    %v1361 = vld [vmem:[#allocation8 + $0x150] sm:$0xff]
    %v1362 = vld [vmem:[#allocation8 + $0x158] sm:$0xff]
    %v1363 = vld [vmem:[#allocation8 + $0x160] sm:$0xff]
    %v1364 = vld [vmem:[#allocation8 + $0x168] sm:$0xff]
    %v1365 = vld [vmem:[#allocation8 + $0x170] sm:$0xff]
    %v1366 = vld [vmem:[#allocation8 + $0x178] sm:$0xff]
    %v1367 = vld [vmem:[#allocation8 + $0x180] sm:$0xff]
    %v1368 = vld [vmem:[#allocation8 + $0x188] sm:$0xff]
    %v1369 = vld [vmem:[#allocation8 + $0x190] sm:$0xff]
    %v1370 = vld [vmem:[#allocation8 + $0x198] sm:$0xff]
    %v1371 = vld [vmem:[#allocation8 + $0x1a0] sm:$0xff]
    %v1372 = vld [vmem:[#allocation8 + $0x1a8] sm:$0xff]
    %v1373 = vld [vmem:[#allocation8 + $0x1b0] sm:$0xff]
    %v1374 = vld [vmem:[#allocation8 + $0x1b8] sm:$0xff]
    %v1375 = vld [vmem:[#allocation8 + $0x1c0] sm:$0xff]
    %v1376 = vld [vmem:[#allocation8 + $0x1c8] sm:$0xff]
    %v1377 = vld [vmem:[#allocation8 + $0x1d0] sm:$0xff]
    %v1378 = vld [vmem:[#allocation8 + $0x1d8] sm:$0xff]
    %v1379 = vld [vmem:[#allocation8 + $0x1e0] sm:$0xff]
    %v1380 = vld [vmem:[#allocation8 + $0x1e8] sm:$0xff]
    %v1381 = vld [vmem:[#allocation8 + $0x1f0] sm:$0xff]
    %v1382 = vld [vmem:[#allocation8 + $0x1f8] sm:$0xff]
    %v1383 = vld [vmem:[%s6] sm:$0x3]
    %v1385 = vlaneseq
    %v1386 = vshrl.u32 %v1385, 7
    %v1387 = vsub.s32 0, %v1386
    %v1388 = vrot.slane %v1383, %v1387
    %v1389 = vlaneseq
    %v1390 = vshrl.u32 %v1389, 7
    %v1391 = vsub.s32 1, %v1390
    %v1392 = vrot.slane %v1383, %v1391
    %v1459 = vunpack.c.l.b16 %v1319
    %v1460 = vunpack.c.h.b16 %v1319
    %v1461 = vunpack.c.l.b16 %v1320
    %v1462 = vunpack.c.h.b16 %v1320
    %v1463 = vunpack.c.l.b16 %v1321
    %v1464 = vunpack.c.h.b16 %v1321
    %v1465 = vunpack.c.l.b16 %v1322
    %v1466 = vunpack.c.h.b16 %v1322
    %v1467 = vunpack.c.l.b16 %v1323
    %v1468 = vunpack.c.h.b16 %v1323
    %v1469 = vunpack.c.l.b16 %v1324
    %v1470 = vunpack.c.h.b16 %v1324
    %v1471 = vunpack.c.l.b16 %v1325
    %v1472 = vunpack.c.h.b16 %v1325
    %v1473 = vunpack.c.l.b16 %v1326
    %v1474 = vunpack.c.h.b16 %v1326
    %v1475 = vunpack.c.l.b16 %v1327
    %v1476 = vunpack.c.h.b16 %v1327
    %v1477 = vunpack.c.l.b16 %v1328
    %v1478 = vunpack.c.h.b16 %v1328
    %v1479 = vunpack.c.l.b16 %v1329
    %v1480 = vunpack.c.h.b16 %v1329
    %v1481 = vunpack.c.l.b16 %v1330
    %v1482 = vunpack.c.h.b16 %v1330
    %v1483 = vunpack.c.l.b16 %v1331
    %v1484 = vunpack.c.h.b16 %v1331
    %v1485 = vunpack.c.l.b16 %v1332
    %v1486 = vunpack.c.h.b16 %v1332
    %v1487 = vunpack.c.l.b16 %v1333
    %v1488 = vunpack.c.h.b16 %v1333
    %v1489 = vunpack.c.l.b16 %v1334
    %v1490 = vunpack.c.h.b16 %v1334
    %v1491 = vunpack.c.l.b16 %v1335
    %v1492 = vunpack.c.h.b16 %v1335
    %v1493 = vunpack.c.l.b16 %v1336
    %v1494 = vunpack.c.h.b16 %v1336
    %v1495 = vunpack.c.l.b16 %v1337
    %v1496 = vunpack.c.h.b16 %v1337
    %v1497 = vunpack.c.l.b16 %v1338
    %v1498 = vunpack.c.h.b16 %v1338
    %v1499 = vunpack.c.l.b16 %v1339
    %v1500 = vunpack.c.h.b16 %v1339
    %v1501 = vunpack.c.l.b16 %v1340
    %v1502 = vunpack.c.h.b16 %v1340
    %v1503 = vunpack.c.l.b16 %v1341
    %v1504 = vunpack.c.h.b16 %v1341
    %v1505 = vunpack.c.l.b16 %v1342
    %v1506 = vunpack.c.h.b16 %v1342
    %v1507 = vunpack.c.l.b16 %v1343
    %v1508 = vunpack.c.h.b16 %v1343
    %v1509 = vunpack.c.l.b16 %v1344
    %v1510 = vunpack.c.h.b16 %v1344
    %v1511 = vunpack.c.l.b16 %v1345
    %v1512 = vunpack.c.h.b16 %v1345
    %v1513 = vunpack.c.l.b16 %v1346
    %v1514 = vunpack.c.h.b16 %v1346
    %v1515 = vunpack.c.l.b16 %v1347
    %v1516 = vunpack.c.h.b16 %v1347
    %v1517 = vunpack.c.l.b16 %v1348
    %v1518 = vunpack.c.h.b16 %v1348
    %v1519 = vunpack.c.l.b16 %v1349
    %v1520 = vunpack.c.h.b16 %v1349
    %v1521 = vunpack.c.l.b16 %v1350
    %v1522 = vunpack.c.h.b16 %v1350
    %v1523 = vunpack.c.l.b16 %v1351
    %v1524 = vunpack.c.h.b16 %v1351
    %v1525 = vunpack.c.l.b16 %v1352
    %v1526 = vunpack.c.h.b16 %v1352
    %v1527 = vunpack.c.l.b16 %v1353
    %v1528 = vunpack.c.h.b16 %v1353
    %v1529 = vunpack.c.l.b16 %v1354
    %v1530 = vunpack.c.h.b16 %v1354
    %v1531 = vunpack.c.l.b16 %v1355
    %v1532 = vunpack.c.h.b16 %v1355
    %v1533 = vunpack.c.l.b16 %v1356
    %v1534 = vunpack.c.h.b16 %v1356
    %v1535 = vunpack.c.l.b16 %v1357
    %v1536 = vunpack.c.h.b16 %v1357
    %v1537 = vunpack.c.l.b16 %v1358
    %v1538 = vunpack.c.h.b16 %v1358
    %v1539 = vunpack.c.l.b16 %v1359
    %v1540 = vunpack.c.h.b16 %v1359
    %v1541 = vunpack.c.l.b16 %v1360
    %v1542 = vunpack.c.h.b16 %v1360
    %v1543 = vunpack.c.l.b16 %v1361
    %v1544 = vunpack.c.h.b16 %v1361
    %v1545 = vunpack.c.l.b16 %v1362
    %v1546 = vunpack.c.h.b16 %v1362
    %v1547 = vunpack.c.l.b16 %v1363
    %v1548 = vunpack.c.h.b16 %v1363
    %v1549 = vunpack.c.l.b16 %v1364
    %v1550 = vunpack.c.h.b16 %v1364
    %v1551 = vunpack.c.l.b16 %v1365
    %v1552 = vunpack.c.h.b16 %v1365
    %v1553 = vunpack.c.l.b16 %v1366
    %v1554 = vunpack.c.h.b16 %v1366
    %v1555 = vunpack.c.l.b16 %v1367
    %v1556 = vunpack.c.h.b16 %v1367
    %v1557 = vunpack.c.l.b16 %v1368
    %v1558 = vunpack.c.h.b16 %v1368
    %v1559 = vunpack.c.l.b16 %v1369
    %v1560 = vunpack.c.h.b16 %v1369
    %v1561 = vunpack.c.l.b16 %v1370
    %v1562 = vunpack.c.h.b16 %v1370
    %v1563 = vunpack.c.l.b16 %v1371
    %v1564 = vunpack.c.h.b16 %v1371
    %v1565 = vunpack.c.l.b16 %v1372
    %v1566 = vunpack.c.h.b16 %v1372
    %v1567 = vunpack.c.l.b16 %v1373
    %v1568 = vunpack.c.h.b16 %v1373
    %v1569 = vunpack.c.l.b16 %v1374
    %v1570 = vunpack.c.h.b16 %v1374
    %v1571 = vunpack.c.l.b16 %v1375
    %v1572 = vunpack.c.h.b16 %v1375
    %v1573 = vunpack.c.l.b16 %v1376
    %v1574 = vunpack.c.h.b16 %v1376
    %v1575 = vunpack.c.l.b16 %v1377
    %v1576 = vunpack.c.h.b16 %v1377
    %v1577 = vunpack.c.l.b16 %v1378
    %v1578 = vunpack.c.h.b16 %v1378
    %v1579 = vunpack.c.l.b16 %v1379
    %v1580 = vunpack.c.h.b16 %v1379
    %v1581 = vunpack.c.l.b16 %v1380
    %v1582 = vunpack.c.h.b16 %v1380
    %v1583 = vunpack.c.l.b16 %v1381
    %v1584 = vunpack.c.h.b16 %v1381
    %v1585 = vunpack.c.l.b16 %v1382
    %v1586 = vunpack.c.h.b16 %v1382
    %v1587 = vpack.c.b16 %v1461, %v1459
    %v1588 = vpack.c.b16 %v1462, %v1460
    %v1589 = vpack.c.b16 %v1465, %v1463
    %v1590 = vpack.c.b16 %v1466, %v1464
    %v1591 = vpack.c.b16 %v1469, %v1467
    %v1592 = vpack.c.b16 %v1470, %v1468
    %v1593 = vpack.c.b16 %v1473, %v1471
    %v1594 = vpack.c.b16 %v1474, %v1472
    %v1595 = vpack.c.b16 %v1477, %v1475
    %v1596 = vpack.c.b16 %v1478, %v1476
    %v1597 = vpack.c.b16 %v1481, %v1479
    %v1598 = vpack.c.b16 %v1482, %v1480
    %v1599 = vpack.c.b16 %v1485, %v1483
    %v1600 = vpack.c.b16 %v1486, %v1484
    %v1601 = vpack.c.b16 %v1489, %v1487
    %v1602 = vpack.c.b16 %v1490, %v1488
    %v1603 = vpack.c.b16 %v1493, %v1491
    %v1604 = vpack.c.b16 %v1494, %v1492
    %v1605 = vpack.c.b16 %v1497, %v1495
    %v1606 = vpack.c.b16 %v1498, %v1496
    %v1607 = vpack.c.b16 %v1501, %v1499
    %v1608 = vpack.c.b16 %v1502, %v1500
    %v1609 = vpack.c.b16 %v1505, %v1503
    %v1610 = vpack.c.b16 %v1506, %v1504
    %v1611 = vpack.c.b16 %v1509, %v1507
    %v1612 = vpack.c.b16 %v1510, %v1508
    %v1613 = vpack.c.b16 %v1513, %v1511
    %v1614 = vpack.c.b16 %v1514, %v1512
    %v1615 = vpack.c.b16 %v1517, %v1515
    %v1616 = vpack.c.b16 %v1518, %v1516
    %v1617 = vpack.c.b16 %v1521, %v1519
    %v1618 = vpack.c.b16 %v1522, %v1520
    %v1619 = vpack.c.b16 %v1525, %v1523
    %v1620 = vpack.c.b16 %v1526, %v1524
    %v1621 = vpack.c.b16 %v1529, %v1527
    %v1622 = vpack.c.b16 %v1530, %v1528
    %v1623 = vpack.c.b16 %v1533, %v1531
    %v1624 = vpack.c.b16 %v1534, %v1532
    %v1625 = vpack.c.b16 %v1537, %v1535
    %v1626 = vpack.c.b16 %v1538, %v1536
    %v1627 = vpack.c.b16 %v1541, %v1539
    %v1628 = vpack.c.b16 %v1542, %v1540
    %v1629 = vpack.c.b16 %v1545, %v1543
    %v1630 = vpack.c.b16 %v1546, %v1544
    %v1631 = vpack.c.b16 %v1549, %v1547
    %v1632 = vpack.c.b16 %v1550, %v1548
    %v1633 = vpack.c.b16 %v1553, %v1551
    %v1634 = vpack.c.b16 %v1554, %v1552
    %v1635 = vpack.c.b16 %v1557, %v1555
    %v1636 = vpack.c.b16 %v1558, %v1556
    %v1637 = vpack.c.b16 %v1561, %v1559
    %v1638 = vpack.c.b16 %v1562, %v1560
    %v1639 = vpack.c.b16 %v1565, %v1563
    %v1640 = vpack.c.b16 %v1566, %v1564
    %v1641 = vpack.c.b16 %v1569, %v1567
    %v1642 = vpack.c.b16 %v1570, %v1568
    %v1643 = vpack.c.b16 %v1573, %v1571
    %v1644 = vpack.c.b16 %v1574, %v1572
    %v1645 = vpack.c.b16 %v1577, %v1575
    %v1646 = vpack.c.b16 %v1578, %v1576
    %v1647 = vpack.c.b16 %v1581, %v1579
    %v1648 = vpack.c.b16 %v1582, %v1580
    %v1649 = vpack.c.b16 %v1585, %v1583
    %v1650 = vpack.c.b16 %v1586, %v1584
    %1715 = vmatprep.subr.bf16.mxu0 %v1588
    %1716 = vmatpush1.bf16.msra.mxu0 %v1587
    %1717 = vmatprep.subr.bf16.mxu0 %v1590
    %1718 = vmatpush1.bf16.msra.mxu0 %v1589
    %1719 = vmatprep.subr.bf16.mxu0 %v1592
    %1720 = vmatpush1.bf16.msra.mxu0 %v1591
    %1721 = vmatprep.subr.bf16.mxu0 %v1594
    %1722 = vmatpush1.bf16.msra.mxu0 %v1593
    %1723 = vmatprep.subr.bf16.mxu0 %v1596
    %1724 = vmatpush1.bf16.msra.mxu0 %v1595
    %1725 = vmatprep.subr.bf16.mxu0 %v1598
    %1726 = vmatpush1.bf16.msra.mxu0 %v1597
    %1727 = vmatprep.subr.bf16.mxu0 %v1600
    %1728 = vmatpush1.bf16.msra.mxu0 %v1599
    %1729 = vmatprep.subr.bf16.mxu0 %v1602
    %1730 = vmatpush1.bf16.msra.mxu0 %v1601
    %1731 = vmatprep.subr.bf16.mxu0 %v1604
    %1732 = vmatpush1.bf16.msra.mxu0 %v1603
    %1733 = vmatprep.subr.bf16.mxu0 %v1606
    %1734 = vmatpush1.bf16.msra.mxu0 %v1605
    %1735 = vmatprep.subr.bf16.mxu0 %v1608
    %1736 = vmatpush1.bf16.msra.mxu0 %v1607
    %1737 = vmatprep.subr.bf16.mxu0 %v1610
    %1738 = vmatpush1.bf16.msra.mxu0 %v1609
    %1739 = vmatprep.subr.bf16.mxu0 %v1612
    %1740 = vmatpush1.bf16.msra.mxu0 %v1611
    %1741 = vmatprep.subr.bf16.mxu0 %v1614
    %1742 = vmatpush1.bf16.msra.mxu0 %v1613
    %1743 = vmatprep.subr.bf16.mxu0 %v1616
    %1744 = vmatpush1.bf16.msra.mxu0 %v1615
    %1745 = vmatprep.subr.bf16.mxu0 %v1618
    %1746 = vmatpush1.bf16.msra.mxu0 %v1617
    %1747 = vmatprep.mubr.bf16.mxu0 %v1316
    %1748 = vmatmul.mubr.bf16.gmra.mrb[0].mxu0 %v1315
    %v1749 = vpop.f32.mrb[0].mxu0
    %v1750 = vadd.f32 %v1388, %v1749
    %v1751 = vpop.f32.mrb[0].mxu0
    %v1752 = vadd.f32 %v1392, %v1751
    %v1753 = vpop.f32.mrb[0].mxu0
    %v1754 = vadd.f32 %v1388, %v1753
    %v1755 = vpop.f32.mrb[0].mxu0
    %v1756 = vadd.f32 %v1392, %v1755
    %1757 = vdwg.mxu0
    %1758 = vmatprep.subr.bf16.mxu0 %v1620
    %1759 = vmatpush1.bf16.msra.mxu0 %v1619
    %1760 = vmatprep.subr.bf16.mxu0 %v1622
    %1761 = vmatpush1.bf16.msra.mxu0 %v1621
    %1762 = vmatprep.subr.bf16.mxu0 %v1624
    %1763 = vmatpush1.bf16.msra.mxu0 %v1623
    %1764 = vmatprep.subr.bf16.mxu0 %v1626
    %1765 = vmatpush1.bf16.msra.mxu0 %v1625
    %1766 = vmatprep.subr.bf16.mxu0 %v1628
    %1767 = vmatpush1.bf16.msra.mxu0 %v1627
    %1768 = vmatprep.subr.bf16.mxu0 %v1630
    %1769 = vmatpush1.bf16.msra.mxu0 %v1629
    %1770 = vmatprep.subr.bf16.mxu0 %v1632
    %1771 = vmatpush1.bf16.msra.mxu0 %v1631
    %1772 = vmatprep.subr.bf16.mxu0 %v1634
    %1773 = vmatpush1.bf16.msra.mxu0 %v1633
    %1774 = vmatprep.subr.bf16.mxu0 %v1636
    %1775 = vmatpush1.bf16.msra.mxu0 %v1635
    %1776 = vmatprep.subr.bf16.mxu0 %v1638
    %1777 = vmatpush1.bf16.msra.mxu0 %v1637
    %1778 = vmatprep.subr.bf16.mxu0 %v1640
    %1779 = vmatpush1.bf16.msra.mxu0 %v1639
    %1780 = vmatprep.subr.bf16.mxu0 %v1642
    %1781 = vmatpush1.bf16.msra.mxu0 %v1641
    %1782 = vmatprep.subr.bf16.mxu0 %v1644
    %1783 = vmatpush1.bf16.msra.mxu0 %v1643
    %1784 = vmatprep.subr.bf16.mxu0 %v1646
    %1785 = vmatpush1.bf16.msra.mxu0 %v1645
    %1786 = vmatprep.subr.bf16.mxu0 %v1648
    %1787 = vmatpush1.bf16.msra.mxu0 %v1647
    %1788 = vmatprep.subr.bf16.mxu0 %v1650
    %1789 = vmatpush1.bf16.msra.mxu0 %v1649
    %1790 = vmatprep.mubr.bf16.mxu0 %v1318
    %1791 = vmatmul.mubr.bf16.gmra.mrb[0].mxu0 %v1317
    %v1792 = vpop.f32.mrb[0].mxu0
    %v1793 = vadd.f32 %v1750, %v1792
    %v1794 = vpop.f32.mrb[0].mxu0
    %v1795 = vadd.f32 %v1752, %v1794
    %v1796 = vpop.f32.mrb[0].mxu0
    %v1797 = vadd.f32 %v1754, %v1796
    %v1798 = vpop.f32.mrb[0].mxu0
    %v1799 = vadd.f32 %v1756, %v1798
    %1800 = vdwg.mxu0
    %v1801 = vmax.f32 %v1793, 0.0
    %v1802 = vmax.f32 %v1795, 0.0
    %v1803 = vmax.f32 %v1797, 0.0
    %v1804 = vmax.f32 %v1799, 0.0
    %v1805 = vpack.c.bf16 %v1803, %v1801
    %v1806 = vpack.c.bf16 %v1804, %v1802
    %v1807 = vld [vmem:[#allocation10] sm:$0xf]
    %v1808 = vld [vmem:[#allocation10 + $0x4] sm:$0xf]
    %v1809 = vld [vmem:[#allocation10 + $0x8] sm:$0xf]
    %v1810 = vld [vmem:[#allocation10 + $0xc] sm:$0xf]
    %v1811 = vld [vmem:[#allocation10 + $0x10] sm:$0xf]
    %v1812 = vld [vmem:[#allocation10 + $0x14] sm:$0xf]
    %v1813 = vld [vmem:[#allocation10 + $0x18] sm:$0xf]
    %v1814 = vld [vmem:[#allocation10 + $0x1c] sm:$0xf]
    %v1815 = vld [vmem:[#allocation10 + $0x20] sm:$0xf]
    %v1816 = vld [vmem:[#allocation10 + $0x24] sm:$0xf]
    %v1817 = vld [vmem:[#allocation10 + $0x28] sm:$0xf]
    %v1818 = vld [vmem:[#allocation10 + $0x2c] sm:$0xf]
    %v1819 = vld [vmem:[#allocation10 + $0x30] sm:$0xf]
    %v1820 = vld [vmem:[#allocation10 + $0x34] sm:$0xf]
    %v1821 = vld [vmem:[#allocation10 + $0x38] sm:$0xf]
    %v1822 = vld [vmem:[#allocation10 + $0x3c] sm:$0xf]
    %v1823 = vld [vmem:[#allocation10 + $0x40] sm:$0xf]
    %v1824 = vld [vmem:[#allocation10 + $0x44] sm:$0xf]
    %v1825 = vld [vmem:[#allocation10 + $0x48] sm:$0xf]
    %v1826 = vld [vmem:[#allocation10 + $0x4c] sm:$0xf]
    %v1827 = vld [vmem:[#allocation10 + $0x50] sm:$0xf]
    %v1828 = vld [vmem:[#allocation10 + $0x54] sm:$0xf]
    %v1829 = vld [vmem:[#allocation10 + $0x58] sm:$0xf]
    %v1830 = vld [vmem:[#allocation10 + $0x5c] sm:$0xf]
    %v1831 = vld [vmem:[#allocation10 + $0x60] sm:$0xf]
    %v1832 = vld [vmem:[#allocation10 + $0x64] sm:$0xf]
    %v1833 = vld [vmem:[#allocation10 + $0x68] sm:$0xf]
    %v1834 = vld [vmem:[#allocation10 + $0x6c] sm:$0xf]
    %v1835 = vld [vmem:[#allocation10 + $0x70] sm:$0xf]
    %v1836 = vld [vmem:[#allocation10 + $0x74] sm:$0xf]
    %v1837 = vld [vmem:[#allocation10 + $0x78] sm:$0xf]
    %v1838 = vld [vmem:[#allocation10 + $0x7c] sm:$0xf]
    %v1839 = vld [vmem:[%s8] sm:$0x1]
    %v1841 = vlaneseq
    %v1842 = vshrl.u32 %v1841, 7
    %v1843 = vsub.s32 0, %v1842
    %v1844 = vrot.slane %v1839, %v1843
    %v1878 = vunpack.c.l.b16 %v1807
    %v1879 = vunpack.c.l.b16 %v1808
    %v1880 = vunpack.c.l.b16 %v1809
    %v1881 = vunpack.c.l.b16 %v1810
    %v1882 = vunpack.c.l.b16 %v1811
    %v1883 = vunpack.c.l.b16 %v1812
    %v1884 = vunpack.c.l.b16 %v1813
    %v1885 = vunpack.c.l.b16 %v1814
    %v1886 = vunpack.c.l.b16 %v1815
    %v1887 = vunpack.c.l.b16 %v1816
    %v1888 = vunpack.c.l.b16 %v1817
    %v1889 = vunpack.c.l.b16 %v1818
    %v1890 = vunpack.c.l.b16 %v1819
    %v1891 = vunpack.c.l.b16 %v1820
    %v1892 = vunpack.c.l.b16 %v1821
    %v1893 = vunpack.c.l.b16 %v1822
    %v1894 = vunpack.c.l.b16 %v1823
    %v1895 = vunpack.c.l.b16 %v1824
    %v1896 = vunpack.c.l.b16 %v1825
    %v1897 = vunpack.c.l.b16 %v1826
    %v1898 = vunpack.c.l.b16 %v1827
    %v1899 = vunpack.c.l.b16 %v1828
    %v1900 = vunpack.c.l.b16 %v1829
    %v1901 = vunpack.c.l.b16 %v1830
    %v1902 = vunpack.c.l.b16 %v1831
    %v1903 = vunpack.c.l.b16 %v1832
    %v1904 = vunpack.c.l.b16 %v1833
    %v1905 = vunpack.c.l.b16 %v1834
    %v1906 = vunpack.c.l.b16 %v1835
    %v1907 = vunpack.c.l.b16 %v1836
    %v1908 = vunpack.c.l.b16 %v1837
    %v1909 = vunpack.c.l.b16 %v1838
    %v1910 = vpack.c.b16 %v1879, %v1878
    %v1911 = vpack.c.b16 %v1881, %v1880
    %v1912 = vpack.c.b16 %v1883, %v1882
    %v1913 = vpack.c.b16 %v1885, %v1884
    %v1914 = vpack.c.b16 %v1887, %v1886
    %v1915 = vpack.c.b16 %v1889, %v1888
    %v1916 = vpack.c.b16 %v1891, %v1890
    %v1917 = vpack.c.b16 %v1893, %v1892
    %v1918 = vpack.c.b16 %v1895, %v1894
    %v1919 = vpack.c.b16 %v1897, %v1896
    %v1920 = vpack.c.b16 %v1899, %v1898
    %v1921 = vpack.c.b16 %v1901, %v1900
    %v1922 = vpack.c.b16 %v1903, %v1902
    %v1923 = vpack.c.b16 %v1905, %v1904
    %v1924 = vpack.c.b16 %v1907, %v1906
    %v1925 = vpack.c.b16 %v1909, %v1908
    %1942 = vmatprep.subr.bf16.mxu0 0
    %1943 = vmatpush1.bf16.msra.mxu0 %v1910
    %1944 = vmatprep.subr.bf16.mxu0 0
    %1945 = vmatpush1.bf16.msra.mxu0 %v1911
    %1946 = vmatprep.subr.bf16.mxu0 0
    %1947 = vmatpush1.bf16.msra.mxu0 %v1912
    %1948 = vmatprep.subr.bf16.mxu0 0
    %1949 = vmatpush1.bf16.msra.mxu0 %v1913
    %1950 = vmatprep.subr.bf16.mxu0 0
    %1951 = vmatpush1.bf16.msra.mxu0 %v1914
    %1952 = vmatprep.subr.bf16.mxu0 0
    %1953 = vmatpush1.bf16.msra.mxu0 %v1915
    %1954 = vmatprep.subr.bf16.mxu0 0
    %1955 = vmatpush1.bf16.msra.mxu0 %v1916
    %1956 = vmatprep.subr.bf16.mxu0 0
    %1957 = vmatpush1.bf16.msra.mxu0 %v1917
    %1958 = vmatprep.subr.bf16.mxu0 0
    %1959 = vmatpush1.bf16.msra.mxu0 %v1918
    %1960 = vmatprep.subr.bf16.mxu0 0
    %1961 = vmatpush1.bf16.msra.mxu0 %v1919
    %1962 = vmatprep.subr.bf16.mxu0 0
    %1963 = vmatpush1.bf16.msra.mxu0 %v1920
    %1964 = vmatprep.subr.bf16.mxu0 0
    %1965 = vmatpush1.bf16.msra.mxu0 %v1921
    %1966 = vmatprep.subr.bf16.mxu0 0
    %1967 = vmatpush1.bf16.msra.mxu0 %v1922
    %1968 = vmatprep.subr.bf16.mxu0 0
    %1969 = vmatpush1.bf16.msra.mxu0 %v1923
    %1970 = vmatprep.subr.bf16.mxu0 0
    %1971 = vmatpush1.bf16.msra.mxu0 %v1924
    %1972 = vmatprep.subr.bf16.mxu0 0
    %1973 = vmatpush1.bf16.msra.mxu0 %v1925
    %1974 = vmatprep.mubr.bf16.mxu0 %v1806
    %1975 = vmatmul.mubr.bf16.gmra.mrb[0].mxu0 %v1805
    %v1976 = vpop.f32.mrb[0].mxu0
    %v1977 = vadd.f32 %v1844, %v1976
    %v1978 = vpop.f32.mrb[0].mxu0
    %v1979 = vpop.f32.mrb[0].mxu0
    %v1980 = vadd.f32 %v1844, %v1979
    %v1981 = vpop.f32.mrb[0].mxu0
    %1982 = vdwg.mxu0
    %v1983 = vmax.f32 %v1977, 0.0
    %v1984 = vmax.f32 %v1980, 0.0
    %v1985 = vpack.c.bf16 %v1984, %v1983
    %v1986 = vld [vmem:[#allocation11] sm:$0xf]
    %v1987 = vld [vmem:[#allocation11 + $0x4] sm:$0xf]
    %v1988 = vld [vmem:[#allocation11 + $0x8] sm:$0xf]
    %v1989 = vld [vmem:[#allocation11 + $0xc] sm:$0xf]
    %v1990 = vld [vmem:[#allocation11 + $0x10] sm:$0xf]
    %v1991 = vld [vmem:[#allocation11 + $0x14] sm:$0xf]
    %v1992 = vld [vmem:[#allocation11 + $0x18] sm:$0xf]
    %v1993 = vld [vmem:[#allocation11 + $0x1c] sm:$0xf]
    %v1994 = vld [vmem:[#allocation11 + $0x20] sm:$0xf]
    %v1995 = vld [vmem:[#allocation11 + $0x24] sm:$0xf]
    %v1996 = vld [vmem:[#allocation11 + $0x28] sm:$0xf]
    %v1997 = vld [vmem:[#allocation11 + $0x2c] sm:$0xf]
    %v1998 = vld [vmem:[#allocation11 + $0x30] sm:$0xf]
    %v1999 = vld [vmem:[#allocation11 + $0x34] sm:$0xf]
    %v2000 = vld [vmem:[#allocation11 + $0x38] sm:$0xf]
    %v2001 = vld [vmem:[#allocation11 + $0x3c] sm:$0xf]
    %v2002 = vld [vmem:[%s10] sm:$0x1]
    %v2004 = vlaneseq
    %v2005 = vshrl.u32 %v2004, 7
    %v2006 = vsub.s32 0, %v2005
    %v2007 = vrot.slane %v2002, %v2006
    %v2025 = vunpack.c.l.b16 %v1986
    %v2026 = vunpack.c.l.b16 %v1987
    %v2027 = vunpack.c.l.b16 %v1988
    %v2028 = vunpack.c.l.b16 %v1989
    %v2029 = vunpack.c.l.b16 %v1990
    %v2030 = vunpack.c.l.b16 %v1991
    %v2031 = vunpack.c.l.b16 %v1992
    %v2032 = vunpack.c.l.b16 %v1993
    %v2033 = vunpack.c.l.b16 %v1994
    %v2034 = vunpack.c.l.b16 %v1995
    %v2035 = vunpack.c.l.b16 %v1996
    %v2036 = vunpack.c.l.b16 %v1997
    %v2037 = vunpack.c.l.b16 %v1998
    %v2038 = vunpack.c.l.b16 %v1999
    %v2039 = vunpack.c.l.b16 %v2000
    %v2040 = vunpack.c.l.b16 %v2001
    %v2041 = vpack.c.b16 %v2026, %v2025
    %v2042 = vpack.c.b16 %v2028, %v2027
    %v2043 = vpack.c.b16 %v2030, %v2029
    %v2044 = vpack.c.b16 %v2032, %v2031
    %v2045 = vpack.c.b16 %v2034, %v2033
    %v2046 = vpack.c.b16 %v2036, %v2035
    %v2047 = vpack.c.b16 %v2038, %v2037
    %v2048 = vpack.c.b16 %v2040, %v2039
    %2057 = vmatprep.subr.bf16.mxu0 0
    %2058 = vmatpush1.bf16.msra.mxu0 %v2041
    %2059 = vmatprep.subr.bf16.mxu0 0
    %2060 = vmatpush1.bf16.msra.mxu0 %v2042
    %2061 = vmatprep.subr.bf16.mxu0 0
    %2062 = vmatpush1.bf16.msra.mxu0 %v2043
    %2063 = vmatprep.subr.bf16.mxu0 0
    %2064 = vmatpush1.bf16.msra.mxu0 %v2044
    %2065 = vmatprep.subr.bf16.mxu0 0
    %2066 = vmatpush1.bf16.msra.mxu0 %v2045
    %2067 = vmatprep.subr.bf16.mxu0 0
    %2068 = vmatpush1.bf16.msra.mxu0 %v2046
    %2069 = vmatprep.subr.bf16.mxu0 0
    %2070 = vmatpush1.bf16.msra.mxu0 %v2047
    %2071 = vmatprep.subr.bf16.mxu0 0
    %2072 = vmatpush1.bf16.msra.mxu0 %v2048
    %2073 = vmatprep.subr.bf16.mxu0 0
    %2074 = vmatpush1.bf16.msra.mxu0 0
    %2075 = vmatprep.subr.bf16.mxu0 0
    %2076 = vmatpush1.bf16.msra.mxu0 0
    %2077 = vmatprep.subr.bf16.mxu0 0
    %2078 = vmatpush1.bf16.msra.mxu0 0
    %2079 = vmatprep.subr.bf16.mxu0 0
    %2080 = vmatpush1.bf16.msra.mxu0 0
    %2081 = vmatprep.subr.bf16.mxu0 0
    %2082 = vmatpush1.bf16.msra.mxu0 0
    %2083 = vmatprep.subr.bf16.mxu0 0
    %2084 = vmatpush1.bf16.msra.mxu0 0
    %2085 = vmatprep.subr.bf16.mxu0 0
    %2086 = vmatpush1.bf16.msra.mxu0 0
    %2087 = vmatprep.subr.bf16.mxu0 0
    %2088 = vmatpush1.bf16.msra.mxu0 0
    %2089 = vmatprep.mubr.bf16.mxu0 0
    %2090 = vmatmul.mubr.bf16.gmra.mrb[0].mxu0 %v1985
    %v2091 = vpop.f32.mrb[0].mxu0
    %v2092 = vadd.f32 %v2007, %v2091
    %v2093 = vpop.f32.mrb[0].mxu0
    %v2094 = vpop.f32.mrb[0].mxu0
    %v2095 = vadd.f32 %v2007, %v2094
    %v2096 = vpop.f32.mrb[0].mxu0
    %2097 = vdwg.mxu0
    %v2098 = vmul.f32 %v2092, %v2092
    %v2099 = vmul.f32 %v2095, %v2095
    %2100 = vadd.xlane.f32.xlu0 %v2098
    %v2101 = vpop.xlane.xlu0 %2100
    %2102 = vadd.xlane.f32.xlu0 %v2099
    %v2103 = vpop.xlane.xlu0 %2102
    %v2104 = vmax.f32 %v2101, 1e-24
    %v2105 = vmax.f32 %v2103, 1e-24
    %v2106 = vrsqrt.pop %v2104
    %v2107 = vrsqrt.pop %v2105
    %v2108 = vmul.f32 %v2092, %v2106
    %v2109 = vmul.f32 %v2095, %v2107
    %2110 = vst [vmem:[#allocation13] sm:$0xff] %v2108
    %2111 = vst [vmem:[#allocation13 + $0x8] sm:$0xff] %v2109
    // Predicated region
    $region70: #{tpu_custom_call.1} parent=1 // pred_check
      _
    $region71: #{tpu_custom_call.1} parent=1 // pred_check_branch
      %2113 = sbr.rel (0) target = $region73
    $region72: #{tpu_custom_call.1} parent=1 // pred_region
      %s2115 = ssub.s32 256, 256
      %2116 = vsyncadd [#allocation4], %s2115
      %s2117 = sshll.u32 [#allocation13], 4
      %s2118 = int_to_ptr.vmem [resolvable:$true] %s2117
      %2123 = dma.vmem_to_hbm [thread:$0]  %s2118, 256, %s11, [#allocation4], 128, 128, 8
    $region73: #{tpu_custom_call.1} parent=1 // pred_fallthru
      _
    // Predicated region
    $region74: #{tpu_custom_call.1} parent=1 // pred_check
      _
    $region75: #{tpu_custom_call.1} parent=1 // pred_check_branch
      %2125 = sbr.rel (0) target = $region77
    $region76: #{tpu_custom_call.1} parent=1 // pred_region
      %2126 = dma.done [#allocation4], 256
    $region77: #{tpu_custom_call.1} parent=1 // pred_fallthru
      _
    %2127 = vsyncpa [#allocation3], 1
    %2128 = vsyncpa [#allocation6], 1
    %2129 = vsyncpa [#allocation9], 1
    %2130 = vsyncpa [#allocation12], 1
    %2131 = vsyncpa [#allocation4], 1

</llo_original>
